<compile_context>
chip_gen: v6e
topology: v6e:2x2x1
jax: 0.10.0
libtpu: 0.0.40
codegen_flags: <defaults>
</compile_context>

<pallas_src>
import math
import functools

import jax
import jax.numpy as jnp
from jax import lax
from jax.experimental import pallas as pl
from jax.experimental.pallas import tpu as pltpu

DROP_P = 0.1
_KEEP_THR = int(round(DROP_P * float(1 << 31)))  # drop if hash31(ctr) < thr
_M31 = 0x7FFFFFFF                                 # 2^31 - 1 (fits int32)
_MIX1 = 0x7FEB352D                                # < 2^31, fits int32
_MIX2 = 0x846CA68B - (1 << 32)                    # signed-int32 view of 0x846CA68B
_SALT = 1013904223                                # LCG increment, < 2^31


def _hash31(x):
    """Stateless int32 mixer -> pseudo-random values in [0, 2^31).

    Uses only Python-int constants (inlined as literals -> no captured array
    constants).  Values are kept non-negative so >> has no signed-shift bias.
    """
    x = x & _M31
    x = x ^ (x >> 16)
    x = (x * _MIX1) & _M31
    x = x ^ (x >> 15)
    x = (x * _MIX2) & _M31
    x = x ^ (x >> 16)
    return x & _M31


def _attn_kernel(seed_ref, q_ref, k_ref, v_ref, mask_ref, o_ref, *, dim, hb, seq):
    # q_ref/k_ref/v_ref/o_ref: (hb, S, D) blocks; mask_ref: (S, S)
    step = pl.program_id(0)
    seed = seed_ref[0]

    inv_sqrt_d = 1.0 / math.sqrt(dim)
    inv_keep = 1.0 / (1.0 - DROP_P)

    # Hoisted out of the head loop: mask cast + per-element dropout counter base.
    mask = mask_ref[...].astype(jnp.float32)                       # (S, S)
    rows = lax.broadcasted_iota(jnp.int32, (seq, seq), 0)
    cols = lax.broadcasted_iota(jnp.int32, (seq, seq), 1)
    base = (rows * seq + cols) & _M31                              # (S, S) int32

    def head_body(h, carry):
        # bf16 MXU operands, f32 accumulation.  1/sqrt(d) folded into q (SxD mul).
        q = (q_ref[h] * inv_sqrt_d).astype(jnp.bfloat16)           # (S, D)
        k = k_ref[h].astype(jnp.bfloat16)                          # (S, D)

        # QK^T without materializing k.T: contract last dims on the MXU.
        s = lax.dot_general(q, k, (((1,), (1,)), ((), ())),
                            preferred_element_type=jnp.float32)    # (S, S) f32
        s = s + mask

        # Numerically stable softmax over the last dim (kept in f32).
        m = jnp.max(s, axis=-1, keepdims=True)
        p = jnp.exp(s - m)
        l = jnp.sum(p, axis=-1, keepdims=True)

        # Dropout keep-mask: per-head scalar salt, then one xor + hash per element.
        ghead = step * hb + h                                      # global head index
        salt = _hash31(ghead * _SALT + seed)                       # scalar in [0, 2^31)
        keep = _hash31(base ^ salt) >= _KEEP_THR                   # P(keep) = 1 - p

        # Fold softmax normalization and dropout rescale into one (S,1) multiplier.
        scale = inv_keep / l
        w = jnp.where(keep, p * scale, 0.0)                        # (S, S) f32

        out = jnp.dot(w.astype(jnp.bfloat16), v_ref[h].astype(jnp.bfloat16),
                      preferred_element_type=jnp.float32)          # (S, D)
        o_ref[h] = out.astype(o_ref.dtype)
        return carry

    # Unrolled fori_loop: LLO keeps scheduling visibility, but each head's (S,S)
    # temporaries have a bounded live range (unlike a static Python loop).
    lax.fori_loop(0, hb, head_body, 0, unroll=True)


def _vmem_budget_and_limit():
    """Generation-aware VMEM budget (with a safe fallback when no TPU is queryable)."""
    try:
        cap = pltpu.get_tpu_info().vmem_capacity_bytes
    except Exception:
        return 12 * 1024 * 1024, None
    budget = min(cap // 4, 28 * 1024 * 1024)
    limit = min(cap // 2, 64 * 1024 * 1024)
    return budget, limit


def _pick_hb(bh, s, d, itemsize, budget):
    """Largest divisor of bh (<= 8) whose per-step working set fits the budget,
    while keeping >= 2 grid steps (v7x megacore + DMA/compute overlap)."""
    best = 1
    for hb in range(1, min(bh, 8) + 1):
        if bh % hb:
            continue
        if bh >= 2 and bh // hb < 2:
            continue
        qkvo = 4 * hb * s * d * itemsize * 2      # q/k/v/o blocks, double-buffered
        mask_b = 2 * s * s * 4                    # mask block, double-buffered
        temps = 5 * s * s * 4                     # one head's f32 (S,S) temporaries
        if qkvo + mask_b + temps <= budget:
            best = hb
    return best


def attention_dropout(query, key, value, attn_mask, seed=0):
    """query/key/value: [B, H, S, D]; attn_mask: [1, 1, S, S] (or [S, S])."""
    B, H, S, D = query.shape
    BH = B * H
    q = query.reshape(BH, S, D)
    k = key.reshape(BH, S, D)
    v = value.reshape(BH, S, D)
    mask = attn_mask.reshape(S, S)
    seed_arr = jnp.asarray([seed], dtype=jnp.int32)

    budget, vmem_limit = _vmem_budget_and_limit()
    hb = _pick_hb(BH, S, D, query.dtype.itemsize, budget)
    kernel = functools.partial(_attn_kernel, dim=D, hb=hb, seq=S)

    cost = pl.CostEstimate(
        flops=4 * BH * S * S * D,                 # QK^T + PV, 2 flops / MAC
        transcendentals=BH * S * S,               # softmax exp
        bytes_accessed=4 * BH * S * D * query.dtype.itemsize
        + S * S * attn_mask.dtype.itemsize,
    )

    out = pl.pallas_call(
        kernel,
        out_shape=jax.ShapeDtypeStruct((BH, S, D), query.dtype),
        grid_spec=pltpu.PrefetchScalarGridSpec(
            num_scalar_prefetch=1,
            grid=(BH // hb,),
            in_specs=[
                pl.BlockSpec((hb, S, D), lambda i, seed: (i, 0, 0)),
                pl.BlockSpec((hb, S, D), lambda i, seed: (i, 0, 0)),
                pl.BlockSpec((hb, S, D), lambda i, seed: (i, 0, 0)),
                pl.BlockSpec((S, S), lambda i, seed: (0, 0)),  # shared, stays resident
            ],
            out_specs=pl.BlockSpec((hb, S, D), lambda i, seed: (i, 0, 0)),
        ),
        compiler_params=pltpu.CompilerParams(
            # Grid steps are fully independent (stateless hash RNG), so the
            # batch*head axis can be sharded across v7x's two TensorCores.
            dimension_semantics=("parallel",),
            vmem_limit_bytes=vmem_limit,
        ),
        cost_estimate=cost,
    )(seed_arr, q, k, v, mask)

    return out.reshape(B, H, S, D)


if __name__ == "__main__":
    # Small shapes consistent with the module's forward (B, H, S, D) + [1,1,S,S] mask.
    # D is a multiple of 128 (the module uses D=256) -> lane-dense output stores.
    B, H, S, D = 1, 4, 128, 128
    key0 = jax.random.PRNGKey(0)
    kq, kk, kv, km = jax.random.split(key0, 4)
    query = jax.random.normal(kq, (B, H, S, D), dtype=jnp.float32)
    key_t = jax.random.normal(kk, (B, H, S, D), dtype=jnp.float32)
    value = jax.random.normal(kv, (B, H, S, D), dtype=jnp.float32)
    attn_mask = jax.random.normal(km, (1, 1, S, S), dtype=jnp.float32)

    out = attention_dropout(query, key_t, value, attn_mask, seed=0)
    out = jax.block_until_ready(out)
    assert out.shape == (B, H, S, D)
    assert bool(jnp.all(jnp.isfinite(out)))
    print("KERNEL_OK")
</pallas_src>

<mosaic_0001>
module attributes {stable_mosaic.version = 11 : i64} {
  func.func @_attn_kernel(%arg0: i32, %arg1: memref<1xi32, #tpu.memory_space<smem>>, %arg2: memref<2x128x128xf32, #tpu.memory_space<vmem>>, %arg3: memref<2x128x128xf32, #tpu.memory_space<vmem>>, %arg4: memref<2x128x128xf32, #tpu.memory_space<vmem>>, %arg5: memref<128x128xf32, #tpu.memory_space<vmem>>, %arg6: memref<2x128x128xf32, #tpu.memory_space<vmem>>) attributes {dimension_semantics = [#tpu.dimension_semantics<parallel>], iteration_bounds = array<i64: 2>, scalar_prefetch = 1 : i64, scratch_operands = 0 : i64, tpu.core_type = #tpu.core_type<tc>, window_params = [{transform_indices = @transform_0, window_bounds = array<i64: 2, 128, 128>}, {transform_indices = @transform_1, window_bounds = array<i64: 2, 128, 128>}, {transform_indices = @transform_2, window_bounds = array<i64: 2, 128, 128>}, {pipeline_mode = #tpu.pipeline_mode<synchronous>, transform_indices = @transform_3, window_bounds = array<i64: 128, 128>}, {transform_indices = @transform_4, window_bounds = array<i64: 2, 128, 128>}]} {
    %c0 = arith.constant 0 : index
    %0 = memref.load %arg1[%c0] : memref<1xi32, #tpu.memory_space<smem>>
    %c0_0 = arith.constant 0 : index
    %c0_1 = arith.constant 0 : index
    %1 = vector.load %arg5[%c0_0, %c0_1] : memref<128x128xf32, #tpu.memory_space<vmem>>, vector<128x128xf32>
    %2 = tpu.iota {dimensions = array<i32: 0>} : vector<128x128xi32>
    %3 = tpu.iota {dimensions = array<i32: 1>} : vector<128x128xi32>
    %c128_i32 = arith.constant 128 : i32
    %4 = vector.broadcast %c128_i32 : i32 to vector<128x128xi32>
    %5 = arith.muli %2, %4 : vector<128x128xi32>
    %6 = arith.addi %5, %3 : vector<128x128xi32>
    %c2147483647_i32 = arith.constant 2147483647 : i32
    %7 = vector.broadcast %c2147483647_i32 : i32 to vector<128x128xi32>
    %8 = arith.andi %6, %7 : vector<128x128xi32>
    %c0_i32 = arith.constant 0 : i32
    %9 = arith.index_cast %c0_i32 : i32 to index
    %c0_2 = arith.constant 0 : index
    %c0_3 = arith.constant 0 : index
    %10 = vector.load %arg2[%9, %c0_2, %c0_3] : memref<2x128x128xf32, #tpu.memory_space<vmem>>, vector<1x128x128xf32>
    %11 = vector.shape_cast %10 : vector<1x128x128xf32> to vector<128x128xf32>
    %cst = arith.constant 0.0883883461 : f32
    %12 = vector.broadcast %cst : f32 to vector<128x128xf32>
    %13 = arith.mulf %11, %12 : vector<128x128xf32>
    %14 = arith.truncf %13 : vector<128x128xf32> to vector<128x128xbf16>
    %15 = arith.index_cast %c0_i32 : i32 to index
    %c0_4 = arith.constant 0 : index
    %c0_5 = arith.constant 0 : index
    %16 = vector.load %arg3[%15, %c0_4, %c0_5] : memref<2x128x128xf32, #tpu.memory_space<vmem>>, vector<1x128x128xf32>
    %17 = vector.shape_cast %16 : vector<1x128x128xf32> to vector<128x128xf32>
    %18 = arith.truncf %17 : vector<128x128xf32> to vector<128x128xbf16>
    %cst_6 = arith.constant dense<0.000000e+00> : vector<128x128xf32>
    %19 = tpu.matmul %14, %18, %cst_6 {dimension_numbers = #tpu.dot_dimension_numbers<[1], [1], [0], [0], [0, 0, 1, 0], [], []>} : vector<128x128xbf16>, vector<128x128xbf16>, vector<128x128xf32> -> vector<128x128xf32>
    %20 = arith.addf %19, %1 : vector<128x128xf32>
    %cst_7 = arith.constant dense<0xFF800000> : vector<128xf32>
    %21 = vector.multi_reduction <maximumf>, %20, %cst_7 [1] : vector<128x128xf32> to vector<128xf32>
    %22 = vector.shape_cast %21 : vector<128xf32> to vector<128x1xf32>
    %23 = vector.broadcast %22 : vector<128x1xf32> to vector<128x128xf32>
    %24 = arith.subf %20, %23 : vector<128x128xf32>
    %25 = math.exp %24 : vector<128x128xf32>
    %cst_8 = arith.constant dense<0.000000e+00> : vector<128xf32>
    %26 = vector.multi_reduction <add>, %25, %cst_8 [1] : vector<128x128xf32> to vector<128xf32>
    %27 = vector.shape_cast %26 : vector<128xf32> to vector<128x1xf32>
    %c2_i32 = arith.constant 2 : i32
    %28 = arith.muli %arg0, %c2_i32 : i32
    %29 = arith.addi %28, %c0_i32 : i32
    %c1013904223_i32 = arith.constant 1013904223 : i32
    %30 = arith.muli %29, %c1013904223_i32 : i32
    %31 = arith.addi %30, %0 : i32
    %c2147483647_i32_9 = arith.constant 2147483647 : i32
    %32 = arith.andi %31, %c2147483647_i32_9 : i32
    %c16_i32 = arith.constant 16 : i32
    %33 = arith.shrsi %32, %c16_i32 : i32
    %34 = arith.xori %32, %33 : i32
    %c2146121005_i32 = arith.constant 2146121005 : i32
    %35 = arith.muli %34, %c2146121005_i32 : i32
    %c2147483647_i32_10 = arith.constant 2147483647 : i32
    %36 = arith.andi %35, %c2147483647_i32_10 : i32
    %c15_i32 = arith.constant 15 : i32
    %37 = arith.shrsi %36, %c15_i32 : i32
    %38 = arith.xori %36, %37 : i32
    %c-2073254261_i32 = arith.constant -2073254261 : i32
    %39 = arith.muli %38, %c-2073254261_i32 : i32
    %c2147483647_i32_11 = arith.constant 2147483647 : i32
    %40 = arith.andi %39, %c2147483647_i32_11 : i32
    %c16_i32_12 = arith.constant 16 : i32
    %41 = arith.shrsi %40, %c16_i32_12 : i32
    %42 = arith.xori %40, %41 : i32
    %c2147483647_i32_13 = arith.constant 2147483647 : i32
    %43 = arith.andi %42, %c2147483647_i32_13 : i32
    %44 = vector.broadcast %43 : i32 to vector<128x128xi32>
    %45 = arith.xori %8, %44 : vector<128x128xi32>
    %c2147483647_i32_14 = arith.constant 2147483647 : i32
    %46 = vector.broadcast %c2147483647_i32_14 : i32 to vector<128x128xi32>
    %47 = arith.andi %45, %46 : vector<128x128xi32>
    %c16_i32_15 = arith.constant 16 : i32
    %48 = vector.broadcast %c16_i32_15 : i32 to vector<128x128xi32>
    %49 = arith.shrsi %47, %48 : vector<128x128xi32>
    %50 = arith.xori %47, %49 : vector<128x128xi32>
    %c2146121005_i32_16 = arith.constant 2146121005 : i32
    %51 = vector.broadcast %c2146121005_i32_16 : i32 to vector<128x128xi32>
    %52 = arith.muli %50, %51 : vector<128x128xi32>
    %c2147483647_i32_17 = arith.constant 2147483647 : i32
    %53 = vector.broadcast %c2147483647_i32_17 : i32 to vector<128x128xi32>
    %54 = arith.andi %52, %53 : vector<128x128xi32>
    %c15_i32_18 = arith.constant 15 : i32
    %55 = vector.broadcast %c15_i32_18 : i32 to vector<128x128xi32>
    %56 = arith.shrsi %54, %55 : vector<128x128xi32>
    %57 = arith.xori %54, %56 : vector<128x128xi32>
    %c-2073254261_i32_19 = arith.constant -2073254261 : i32
    %58 = vector.broadcast %c-2073254261_i32_19 : i32 to vector<128x128xi32>
    %59 = arith.muli %57, %58 : vector<128x128xi32>
    %c2147483647_i32_20 = arith.constant 2147483647 : i32
    %60 = vector.broadcast %c2147483647_i32_20 : i32 to vector<128x128xi32>
    %61 = arith.andi %59, %60 : vector<128x128xi32>
    %c16_i32_21 = arith.constant 16 : i32
    %62 = vector.broadcast %c16_i32_21 : i32 to vector<128x128xi32>
    %63 = arith.shrsi %61, %62 : vector<128x128xi32>
    %64 = arith.xori %61, %63 : vector<128x128xi32>
    %c2147483647_i32_22 = arith.constant 2147483647 : i32
    %65 = vector.broadcast %c2147483647_i32_22 : i32 to vector<128x128xi32>
    %66 = arith.andi %64, %65 : vector<128x128xi32>
    %c214748365_i32 = arith.constant 214748365 : i32
    %67 = vector.broadcast %c214748365_i32 : i32 to vector<128x128xi32>
    %68 = arith.cmpi sge, %66, %67 : vector<128x128xi32>
    %cst_23 = arith.constant 1.11111116 : f32
    %69 = vector.broadcast %cst_23 : f32 to vector<128x1xf32>
    %70 = arith.divf %69, %27 : vector<128x1xf32>
    %71 = vector.broadcast %70 : vector<128x1xf32> to vector<128x128xf32>
    %72 = arith.mulf %25, %71 : vector<128x128xf32>
    %cst_24 = arith.constant 0.000000e+00 : f32
    %73 = vector.broadcast %cst_24 : f32 to vector<128x128xf32>
    %74 = arith.select %68, %72, %73 : vector<128x128xi1>, vector<128x128xf32>
    %75 = arith.truncf %74 : vector<128x128xf32> to vector<128x128xbf16>
    %76 = arith.index_cast %c0_i32 : i32 to index
    %c0_25 = arith.constant 0 : index
    %c0_26 = arith.constant 0 : index
    %77 = vector.load %arg4[%76, %c0_25, %c0_26] : memref<2x128x128xf32, #tpu.memory_space<vmem>>, vector<1x128x128xf32>
    %78 = vector.shape_cast %77 : vector<1x128x128xf32> to vector<128x128xf32>
    %79 = arith.truncf %78 : vector<128x128xf32> to vector<128x128xbf16>
    %cst_27 = arith.constant dense<0.000000e+00> : vector<128x128xf32>
    %80 = tpu.matmul %75, %79, %cst_27 {dimension_numbers = #tpu.dot_dimension_numbers<[1], [0], [0], [1], [0, 0, 1, 1], [], []>} : vector<128x128xbf16>, vector<128x128xbf16>, vector<128x128xf32> -> vector<128x128xf32>
    %81 = arith.index_cast %c0_i32 : i32 to index
    %c0_28 = arith.constant 0 : index
    %c0_29 = arith.constant 0 : index
    %82 = vector.load %arg6[%81, %c0_28, %c0_29] : memref<2x128x128xf32, #tpu.memory_space<vmem>>, vector<1x128x128xf32>
    %83 = vector.shape_cast %82 : vector<1x128x128xf32> to vector<128x128xf32>
    %84 = vector.shape_cast %80 : vector<128x128xf32> to vector<1x128x128xf32>
    tpu.vector_store %arg6[%81, %c0_28, %c0_29], %84 {strides = array<i32>} : memref<2x128x128xf32, #tpu.memory_space<vmem>>, vector<1x128x128xf32>,
    %c1_i32 = arith.constant 1 : i32
    %85 = arith.index_cast %c1_i32 : i32 to index
    %c0_30 = arith.constant 0 : index
    %c0_31 = arith.constant 0 : index
    %86 = vector.load %arg2[%85, %c0_30, %c0_31] : memref<2x128x128xf32, #tpu.memory_space<vmem>>, vector<1x128x128xf32>
    %87 = vector.shape_cast %86 : vector<1x128x128xf32> to vector<128x128xf32>
    %cst_32 = arith.constant 0.0883883461 : f32
    %88 = vector.broadcast %cst_32 : f32 to vector<128x128xf32>
    %89 = arith.mulf %87, %88 : vector<128x128xf32>
    %90 = arith.truncf %89 : vector<128x128xf32> to vector<128x128xbf16>
    %91 = arith.index_cast %c1_i32 : i32 to index
    %c0_33 = arith.constant 0 : index
    %c0_34 = arith.constant 0 : index
    %92 = vector.load %arg3[%91, %c0_33, %c0_34] : memref<2x128x128xf32, #tpu.memory_space<vmem>>, vector<1x128x128xf32>
    %93 = vector.shape_cast %92 : vector<1x128x128xf32> to vector<128x128xf32>
    %94 = arith.truncf %93 : vector<128x128xf32> to vector<128x128xbf16>
    %cst_35 = arith.constant dense<0.000000e+00> : vector<128x128xf32>
    %95 = tpu.matmul %90, %94, %cst_35 {dimension_numbers = #tpu.dot_dimension_numbers<[1], [1], [0], [0], [0, 0, 1, 0], [], []>} : vector<128x128xbf16>, vector<128x128xbf16>, vector<128x128xf32> -> vector<128x128xf32>
    %96 = arith.addf %95, %1 : vector<128x128xf32>
    %cst_36 = arith.constant dense<0xFF800000> : vector<128xf32>
    %97 = vector.multi_reduction <maximumf>, %96, %cst_36 [1] : vector<128x128xf32> to vector<128xf32>
    %98 = vector.shape_cast %97 : vector<128xf32> to vector<128x1xf32>
    %99 = vector.broadcast %98 : vector<128x1xf32> to vector<128x128xf32>
    %100 = arith.subf %96, %99 : vector<128x128xf32>
    %101 = math.exp %100 : vector<128x128xf32>
    %cst_37 = arith.constant dense<0.000000e+00> : vector<128xf32>
    %102 = vector.multi_reduction <add>, %101, %cst_37 [1] : vector<128x128xf32> to vector<128xf32>
    %103 = vector.shape_cast %102 : vector<128xf32> to vector<128x1xf32>
    %c2_i32_38 = arith.constant 2 : i32
    %104 = arith.muli %arg0, %c2_i32_38 : i32
    %105 = arith.addi %104, %c1_i32 : i32
    %c1013904223_i32_39 = arith.constant 1013904223 : i32
    %106 = arith.muli %105, %c1013904223_i32_39 : i32
    %107 = arith.addi %106, %0 : i32
    %c2147483647_i32_40 = arith.constant 2147483647 : i32
    %108 = arith.andi %107, %c2147483647_i32_40 : i32
    %c16_i32_41 = arith.constant 16 : i32
    %109 = arith.shrsi %108, %c16_i32_41 : i32
    %110 = arith.xori %108, %109 : i32
    %c2146121005_i32_42 = arith.constant 2146121005 : i32
    %111 = arith.muli %110, %c2146121005_i32_42 : i32
    %c2147483647_i32_43 = arith.constant 2147483647 : i32
    %112 = arith.andi %111, %c2147483647_i32_43 : i32
    %c15_i32_44 = arith.constant 15 : i32
    %113 = arith.shrsi %112, %c15_i32_44 : i32
    %114 = arith.xori %112, %113 : i32
    %c-2073254261_i32_45 = arith.constant -2073254261 : i32
    %115 = arith.muli %114, %c-2073254261_i32_45 : i32
    %c2147483647_i32_46 = arith.constant 2147483647 : i32
    %116 = arith.andi %115, %c2147483647_i32_46 : i32
    %c16_i32_47 = arith.constant 16 : i32
    %117 = arith.shrsi %116, %c16_i32_47 : i32
    %118 = arith.xori %116, %117 : i32
    %c2147483647_i32_48 = arith.constant 2147483647 : i32
    %119 = arith.andi %118, %c2147483647_i32_48 : i32
    %120 = vector.broadcast %119 : i32 to vector<128x128xi32>
    %121 = arith.xori %8, %120 : vector<128x128xi32>
    %c2147483647_i32_49 = arith.constant 2147483647 : i32
    %122 = vector.broadcast %c2147483647_i32_49 : i32 to vector<128x128xi32>
    %123 = arith.andi %121, %122 : vector<128x128xi32>
    %c16_i32_50 = arith.constant 16 : i32
    %124 = vector.broadcast %c16_i32_50 : i32 to vector<128x128xi32>
    %125 = arith.shrsi %123, %124 : vector<128x128xi32>
    %126 = arith.xori %123, %125 : vector<128x128xi32>
    %c2146121005_i32_51 = arith.constant 2146121005 : i32
    %127 = vector.broadcast %c2146121005_i32_51 : i32 to vector<128x128xi32>
    %128 = arith.muli %126, %127 : vector<128x128xi32>
    %c2147483647_i32_52 = arith.constant 2147483647 : i32
    %129 = vector.broadcast %c2147483647_i32_52 : i32 to vector<128x128xi32>
    %130 = arith.andi %128, %129 : vector<128x128xi32>
    %c15_i32_53 = arith.constant 15 : i32
    %131 = vector.broadcast %c15_i32_53 : i32 to vector<128x128xi32>
    %132 = arith.shrsi %130, %131 : vector<128x128xi32>
    %133 = arith.xori %130, %132 : vector<128x128xi32>
    %c-2073254261_i32_54 = arith.constant -2073254261 : i32
    %134 = vector.broadcast %c-2073254261_i32_54 : i32 to vector<128x128xi32>
    %135 = arith.muli %133, %134 : vector<128x128xi32>
    %c2147483647_i32_55 = arith.constant 2147483647 : i32
    %136 = vector.broadcast %c2147483647_i32_55 : i32 to vector<128x128xi32>
    %137 = arith.andi %135, %136 : vector<128x128xi32>
    %c16_i32_56 = arith.constant 16 : i32
    %138 = vector.broadcast %c16_i32_56 : i32 to vector<128x128xi32>
    %139 = arith.shrsi %137, %138 : vector<128x128xi32>
    %140 = arith.xori %137, %139 : vector<128x128xi32>
    %c2147483647_i32_57 = arith.constant 2147483647 : i32
    %141 = vector.broadcast %c2147483647_i32_57 : i32 to vector<128x128xi32>
    %142 = arith.andi %140, %141 : vector<128x128xi32>
    %c214748365_i32_58 = arith.constant 214748365 : i32
    %143 = vector.broadcast %c214748365_i32_58 : i32 to vector<128x128xi32>
    %144 = arith.cmpi sge, %142, %143 : vector<128x128xi32>
    %cst_59 = arith.constant 1.11111116 : f32
    %145 = vector.broadcast %cst_59 : f32 to vector<128x1xf32>
    %146 = arith.divf %145, %103 : vector<128x1xf32>
    %147 = vector.broadcast %146 : vector<128x1xf32> to vector<128x128xf32>
    %148 = arith.mulf %101, %147 : vector<128x128xf32>
    %cst_60 = arith.constant 0.000000e+00 : f32
    %149 = vector.broadcast %cst_60 : f32 to vector<128x128xf32>
    %150 = arith.select %144, %148, %149 : vector<128x128xi1>, vector<128x128xf32>
    %151 = arith.truncf %150 : vector<128x128xf32> to vector<128x128xbf16>
    %152 = arith.index_cast %c1_i32 : i32 to index
    %c0_61 = arith.constant 0 : index
    %c0_62 = arith.constant 0 : index
    %153 = vector.load %arg4[%152, %c0_61, %c0_62] : memref<2x128x128xf32, #tpu.memory_space<vmem>>, vector<1x128x128xf32>
    %154 = vector.shape_cast %153 : vector<1x128x128xf32> to vector<128x128xf32>
    %155 = arith.truncf %154 : vector<128x128xf32> to vector<128x128xbf16>
    %cst_63 = arith.constant dense<0.000000e+00> : vector<128x128xf32>
    %156 = tpu.matmul %151, %155, %cst_63 {dimension_numbers = #tpu.dot_dimension_numbers<[1], [0], [0], [1], [0, 0, 1, 1], [], []>} : vector<128x128xbf16>, vector<128x128xbf16>, vector<128x128xf32> -> vector<128x128xf32>
    %157 = arith.index_cast %c1_i32 : i32 to index
    %c0_64 = arith.constant 0 : index
    %c0_65 = arith.constant 0 : index
    %158 = vector.load %arg6[%157, %c0_64, %c0_65] : memref<2x128x128xf32, #tpu.memory_space<vmem>>, vector<1x128x128xf32>
    %159 = vector.shape_cast %158 : vector<1x128x128xf32> to vector<128x128xf32>
    %160 = vector.shape_cast %156 : vector<128x128xf32> to vector<1x128x128xf32>
    tpu.vector_store %arg6[%157, %c0_64, %c0_65], %160 {strides = array<i32>} : memref<2x128x128xf32, #tpu.memory_space<vmem>>, vector<1x128x128xf32>,
    %c2_i32_66 = arith.constant 2 : i32
    return
  }
  func.func @transform_0(%arg0: i32, %arg1: memref<1xi32, #tpu.memory_space<smem>>) -> (i32, i32, i32) {
    %c0_i32 = arith.constant 0 : i32
    %c0_i32_0 = arith.constant 0 : i32
    %c0_i32_1 = arith.constant 0 : i32
    return %arg0, %c0_i32, %c0_i32_0 : i32, i32, i32
  }
  func.func @transform_1(%arg0: i32, %arg1: memref<1xi32, #tpu.memory_space<smem>>) -> (i32, i32, i32) {
    %c0_i32 = arith.constant 0 : i32
    %c0_i32_0 = arith.constant 0 : i32
    %c0_i32_1 = arith.constant 0 : i32
    return %arg0, %c0_i32, %c0_i32_0 : i32, i32, i32
  }
  func.func @transform_2(%arg0: i32, %arg1: memref<1xi32, #tpu.memory_space<smem>>) -> (i32, i32, i32) {
    %c0_i32 = arith.constant 0 : i32
    %c0_i32_0 = arith.constant 0 : i32
    %c0_i32_1 = arith.constant 0 : i32
    return %arg0, %c0_i32, %c0_i32_0 : i32, i32, i32
  }
  func.func @transform_3(%arg0: i32, %arg1: memref<1xi32, #tpu.memory_space<smem>>) -> (i32, i32) {
    %c0_i32 = arith.constant 0 : i32
    %c0_i32_0 = arith.constant 0 : i32
    %c0_i32_1 = arith.constant 0 : i32
    return %c0_i32, %c0_i32_0 : i32, i32
  }
  func.func @transform_4(%arg0: i32, %arg1: memref<1xi32, #tpu.memory_space<smem>>) -> (i32, i32, i32) {
    %c0_i32 = arith.constant 0 : i32
    %c0_i32_0 = arith.constant 0 : i32
    %c0_i32_1 = arith.constant 0 : i32
    return %arg0, %c0_i32, %c0_i32_0 : i32, i32, i32
  }
}

</mosaic_0001>

<llo_original>
// kernel: tpu_custom_call.1
$region0: #{tpu_custom_call.1}
  #allocation0 [shape = 'u32[]', space=smem, size = 0x4, offset = 0x4, fixed_abs, tag = 'smem constant byte address 0x4 - core index']
  #allocation1 [shape = 'u32[144,128]{1,0:T(1,128)}', space=vmem, size = 0x12000, scoped, tag = 'internal scratch']
  #allocation2 [shape = 's32[1]{0}', space=sflag, size = 0x4, scoped, tag = 'scoped memory for tpu_custom_call.1']
  #allocation3 [shape = 's32[1]{0:T(128)S(6)}', space=smem, size = 0x200, scoped, tag = 'prefetched SMEM operand 0']
  %s0 = inlined_call_operand.<no memory space> [shape: s32[1], index: 0, kind: input, shape index: {}]
  %s1 = inlined_call_operand.hbm [shape: f32[4,128,128], index: 1, kind: input, shape index: {}]
  %s2 = inlined_call_operand.hbm [shape: f32[4,128,128], index: 2, kind: input, shape index: {}]
  %s3 = inlined_call_operand.hbm [shape: f32[4,128,128], index: 3, kind: input, shape index: {}]
  %s4 = inlined_call_operand.hbm [shape: f32[128,128], index: 4, kind: input, shape index: {}]
  %s5 = inlined_call_operand.hbm [shape: f32[4,128,128], index: 5, kind: output, shape index: {}]
  %s6 = sld [smem:[#allocation0]]
  $region65: #{tpu_custom_call.1} parent=0
    _
  %s8 = ssub.s32 1, %s6
  %s9 = scalar_select 0, %s8, %s6
  %10 = sst [smem:[#allocation3]] %s0
  $region1: #{tpu_custom_call.1} parent=0
    #allocation4 [shape = 'u8[262144]{0}', space=vmem, size = 0x40000, scoped, tag = 'input window, operand 1']
    #allocation5 [shape = 's32[2]{0}', space=sflag, size = 0x8, scoped, tag = 'scoped memory for tpu_custom_call.1']
    #allocation6 [shape = 's32[2]{0}', space=sflag, size = 0x8, scoped, tag = 'scoped memory for tpu_custom_call.1']
    #allocation7 [shape = 'u8[262144]{0}', space=vmem, size = 0x40000, scoped, tag = 'input window, operand 2']
    #allocation8 [shape = 's32[2]{0}', space=sflag, size = 0x8, scoped, tag = 'scoped memory for tpu_custom_call.1']
    #allocation9 [shape = 'u8[262144]{0}', space=vmem, size = 0x40000, scoped, tag = 'input window, operand 3']
    #allocation10 [shape = 'u8[65536]{0}', space=vmem, size = 0x10000, scoped, tag = 'input window, operand 4, single buffered']
    #allocation11 [shape = 's32[1]{0}', space=sflag, size = 0x4, scoped, tag = 'scoped memory for tpu_custom_call.1']
    #allocation12 [shape = 'u8[262144]{0}', space=vmem, size = 0x40000, scoped, tag = 'output window, operand 0']
    %11 = vsyncpa [#allocation5], 0
    %s12 = scalar_lea.sflag [#allocation5], 1
    %13 = vsyncpa %s12, 0
    %14 = vsyncpa [#allocation8], 0
    %s15 = scalar_lea.sflag [#allocation8], 1
    %16 = vsyncpa %s15, 0
    %17 = vsyncpa [#allocation11], 0
    %18 = vsyncpa [#allocation6], 0
    %s19 = scalar_lea.sflag [#allocation6], 1
    %20 = vsyncpa %s19, 0
    loop: start=0, step=1, limit=4
    $region2: #{tpu_custom_call.1} parent=1 // loop_pre_header
      _
    $region3: #{tpu_custom_call.1} parent=1 // loop_header
      %s22 = sphi 0, %s26
      %p23 = scmp.ge.s32.totalorder %s22, 4
      %s32 = sphi 0, %s34
      %s35 = sphi 0, %s32
      %s36 = sphi 0, %s35
      %s52 = sphi 0, %s36
      %s58 = sphi 0, %s60
      %s61 = sphi 0, %s58
      %s62 = sphi 0, %s61
      %s78 = sphi 0, %s62
      %s84 = sphi 0, %s86
      %s87 = sphi 0, %s84
      %s88 = sphi 0, %s87
      %s104 = sphi 0, %s88
      %s108 = sphi 0, %s108
      %s110 = sphi 0, %s108
      %s111 = sphi 0, %s110
      %s125 = sphi 0, %s111
      %s131 = sphi 0, %s133
      %s134 = sphi 0, %s131
      %s135 = sphi 0, %s134
      %s151 = sphi 0, %s135
    $region4: #{tpu_custom_call.1} parent=1 // loop_header_branch
      %25 = sbr.rel (%p23) target = $region8
    $region5: #{tpu_custom_call.1} parent=1 // loop_body
      %s27 = ssub.s32 %s22, 1
      %s28 = ssub.s32 %s22, 2
      %s29 = sadd.s32 %s22, 1
      %s30 = ssub.s32 %s22, %s29
      %p31 = scmp.eq.s32.totalorder %s30, 0
      %s33 = sadd.s32 %s32, 1
      %s34 = scalar_select %p31, %s32, %s33
      %p37 = pneg %p31
      %p38 = scmp.eq.s32.totalorder %s22, 1
      %p39 = por %p37, %p38
      %p40 = scmp.ne.s32.totalorder %s32, %s35
      %p41 = scmp.eq.s32.totalorder %s22, 0
      %p42 = por %p40, %p41
      %p43 = scmp.ne.s32.totalorder %s32, %s35
      %p44 = scmp.eq.s32.totalorder %s27, 1
      %p45 = por %p43, %p44
      %p46 = scmp.ne.s32.totalorder %s35, %s36
      %p47 = scmp.eq.s32.totalorder %s27, 0
      %p48 = por %p46, %p47
      %p49 = scmp.ne.s32.totalorder %s35, %s36
      %p50 = scmp.eq.s32.totalorder %s28, 1
      %p51 = por %p49, %p50
      %p53 = scmp.ne.s32.totalorder %s36, %s52
      %p54 = scmp.eq.s32.totalorder %s28, 0
      %p55 = por %p53, %p54
      %s56 = ssub.s32 %s22, %s29
      %p57 = scmp.eq.s32.totalorder %s56, 0
      %s59 = sadd.s32 %s58, 1
      %s60 = scalar_select %p57, %s58, %s59
      %p63 = pneg %p57
      %p64 = scmp.eq.s32.totalorder %s22, 1
      %p65 = por %p63, %p64
      %p66 = scmp.ne.s32.totalorder %s58, %s61
      %p67 = scmp.eq.s32.totalorder %s22, 0
      %p68 = por %p66, %p67
      %p69 = scmp.ne.s32.totalorder %s58, %s61
      %p70 = scmp.eq.s32.totalorder %s27, 1
      %p71 = por %p69, %p70
      %p72 = scmp.ne.s32.totalorder %s61, %s62
      %p73 = scmp.eq.s32.totalorder %s27, 0
      %p74 = por %p72, %p73
      %p75 = scmp.ne.s32.totalorder %s61, %s62
      %p76 = scmp.eq.s32.totalorder %s28, 1
      %p77 = por %p75, %p76
      %p79 = scmp.ne.s32.totalorder %s62, %s78
      %p80 = scmp.eq.s32.totalorder %s28, 0
      %p81 = por %p79, %p80
      %s82 = ssub.s32 %s22, %s29
      %p83 = scmp.eq.s32.totalorder %s82, 0
      %s85 = sadd.s32 %s84, 1
      %s86 = scalar_select %p83, %s84, %s85
      %p89 = pneg %p83
      %p90 = scmp.eq.s32.totalorder %s22, 1
      %p91 = por %p89, %p90
      %p92 = scmp.ne.s32.totalorder %s84, %s87
      %p93 = scmp.eq.s32.totalorder %s22, 0
      %p94 = por %p92, %p93
      %p95 = scmp.ne.s32.totalorder %s84, %s87
      %p96 = scmp.eq.s32.totalorder %s27, 1
      %p97 = por %p95, %p96
      %p98 = scmp.ne.s32.totalorder %s87, %s88
      %p99 = scmp.eq.s32.totalorder %s27, 0
      %p100 = por %p98, %p99
      %p101 = scmp.ne.s32.totalorder %s87, %s88
      %p102 = scmp.eq.s32.totalorder %s28, 1
      %p103 = por %p101, %p102
      %p105 = scmp.ne.s32.totalorder %s88, %s104
      %p106 = scmp.eq.s32.totalorder %s28, 0
      %p107 = por %p105, %p106
      %s109 = sadd.s32 %s108, 1
      %p112 = scmp.eq.s32.totalorder %s22, 1
      %p113 = scmp.ne.s32.totalorder %s108, %s110
      %p114 = scmp.eq.s32.totalorder %s22, 0
      %p115 = por %p113, %p114
      %p116 = scmp.ne.s32.totalorder %s108, %s110
      %p117 = scmp.eq.s32.totalorder %s27, 1
      %p118 = por %p116, %p117
      %p119 = scmp.ne.s32.totalorder %s110, %s111
      %p120 = scmp.eq.s32.totalorder %s27, 0
      %p121 = por %p119, %p120
      %p122 = scmp.ne.s32.totalorder %s110, %s111
      %p123 = scmp.eq.s32.totalorder %s28, 1
      %p124 = por %p122, %p123
      %p126 = scmp.ne.s32.totalorder %s111, %s125
      %p127 = scmp.eq.s32.totalorder %s28, 0
      %p128 = por %p126, %p127
      %s129 = ssub.s32 %s22, %s29
      %p130 = scmp.eq.s32.totalorder %s129, 0
      %s132 = sadd.s32 %s131, 1
      %s133 = scalar_select %p130, %s131, %s132
      %p136 = pneg %p130
      %p137 = scmp.eq.s32.totalorder %s22, 1
      %p138 = por %p136, %p137
      %p139 = scmp.ne.s32.totalorder %s131, %s134
      %p140 = scmp.eq.s32.totalorder %s22, 0
      %p141 = por %p139, %p140
      %p142 = scmp.ne.s32.totalorder %s131, %s134
      %p143 = scmp.eq.s32.totalorder %s27, 1
      %p144 = por %p142, %p143
      %p145 = scmp.ne.s32.totalorder %s134, %s135
      %p146 = scmp.eq.s32.totalorder %s27, 0
      %p147 = por %p145, %p146
      %p148 = scmp.ne.s32.totalorder %s134, %s135
      %p149 = scmp.eq.s32.totalorder %s28, 1
      %p150 = por %p148, %p149
      %p152 = scmp.ne.s32.totalorder %s135, %s151
      %p153 = scmp.eq.s32.totalorder %s28, 0
      %p154 = por %p152, %p153
      %p155 = scmp.le.s32.totalorder 1, %s22
      %p156 = scmp.lt.s32.totalorder %s22, 3
      %p157 = pnand %p155, %p156
      %p158 = pneg %p157
      // Predicated region
      $region9: #{tpu_custom_call.1} parent=5 // pred_check
        _
      $region10: #{tpu_custom_call.1} parent=5 // pred_check_branch
        %160 = sbr.rel (%p157) target = $region12
      $region11: #{tpu_custom_call.1} parent=5 // pred_region
        %s161 = ssub.s32 %s22, 1
        // Predicated region
        $region13: #{tpu_custom_call.1} parent=11 // pred_check
          %p162 = pneg %p121
        $region14: #{tpu_custom_call.1} parent=11 // pred_check_branch
          %164 = sbr.rel (%p162) target = $region16
        $region15: #{tpu_custom_call.1} parent=11 // pred_region
          %s166 = ssub.s32 2048, 2048
          %167 = vsyncadd [#allocation11], %s166
          %s168 = sshll.u32 [#allocation10], 4
          %s169 = int_to_ptr.vmem [resolvable:$true] %s168
          %174 = dma.hbm_to_vmem [thread:$0]  %s4, 2048, %s169, [#allocation11], 128, 128, 8
        $region16: #{tpu_custom_call.1} parent=11 // pred_fallthru
          _
      $region12: #{tpu_custom_call.1} parent=5 // pred_fallthru
        _
      %p175 = scmp.lt.s32.totalorder %s22, 2
      // Predicated region
      $region17: #{tpu_custom_call.1} parent=5 // pred_check
        %p176 = pneg %p175
      $region18: #{tpu_custom_call.1} parent=5 // pred_check_branch
        %178 = sbr.rel (%p176) target = $region20
      $region19: #{tpu_custom_call.1} parent=5 // pred_region
        // Predicated region
        $region21: #{tpu_custom_call.1} parent=19 // pred_check
          %p179 = pneg %p42
        $region22: #{tpu_custom_call.1} parent=19 // pred_check_branch
          %181 = sbr.rel (%p179) target = $region24
        $region23: #{tpu_custom_call.1} parent=19 // pred_region
          %s182 = sand.u32 %s32, 1
          %s183 = scalar_lea.sflag [#allocation5], %s182
          %s184 = sand.u32 %s32, 1
          %s185 = smul.addr %s184, 256
          %s186 = scalar_lea.vmem [#allocation4], %s185
          %s187 = smul.u32 2, %s22
          %s189 = ssub.s32 4096, 4096
          %190 = vsyncadd %s183, %s189
          %s191 = smul.addr %s187, 16
          %s192 = smul.addr %s191, 128
          %s193 = scalar_lea.hbm %s1, %s192
          %s194 = sshll.u32 %s186, 4
          %s195 = int_to_ptr.vmem [resolvable:$true] %s194
          %200 = dma.hbm_to_vmem [thread:$0]  %s193, 4096, %s195, %s183, 128, 128, 8
        $region24: #{tpu_custom_call.1} parent=19 // pred_fallthru
          _
        // Predicated region
        $region25: #{tpu_custom_call.1} parent=19 // pred_check
          %p201 = pneg %p68
        $region26: #{tpu_custom_call.1} parent=19 // pred_check_branch
          %203 = sbr.rel (%p201) target = $region28
        $region27: #{tpu_custom_call.1} parent=19 // pred_region
          %s204 = sand.u32 %s22, 1
          %s205 = scalar_lea.sflag [#allocation8], %s204
          %s206 = sand.u32 %s58, 1
          %s207 = smul.addr %s206, 256
          %s208 = scalar_lea.vmem [#allocation7], %s207
          %s209 = smul.u32 2, %s22
          %s211 = ssub.s32 4096, 4096
          %212 = vsyncadd %s205, %s211
          %s213 = smul.addr %s209, 16
          %s214 = smul.addr %s213, 128
          %s215 = scalar_lea.hbm %s2, %s214
          %s216 = sshll.u32 %s208, 4
          %s217 = int_to_ptr.vmem [resolvable:$true] %s216
          %222 = dma.hbm_to_vmem [thread:$0]  %s215, 4096, %s217, %s205, 128, 128, 8
        $region28: #{tpu_custom_call.1} parent=19 // pred_fallthru
          _
        // Predicated region
        $region29: #{tpu_custom_call.1} parent=19 // pred_check
          %p223 = pneg %p94
        $region30: #{tpu_custom_call.1} parent=19 // pred_check_branch
          %225 = sbr.rel (%p223) target = $region32
        $region31: #{tpu_custom_call.1} parent=19 // pred_region
          %s226 = sand.u32 %s22, 1
          %s227 = scalar_lea.sflag [#allocation8], %s226
          %s228 = sand.u32 %s84, 1
          %s229 = smul.addr %s228, 256
          %s230 = scalar_lea.vmem [#allocation9], %s229
          %s231 = smul.u32 2, %s22
          %s233 = ssub.s32 4096, 4096
          %234 = vsyncadd %s227, %s233
          %s235 = smul.addr %s231, 16
          %s236 = smul.addr %s235, 128
          %s237 = scalar_lea.hbm %s3, %s236
          %s238 = sshll.u32 %s230, 4
          %s239 = int_to_ptr.vmem [resolvable:$true] %s238
          %244 = dma.hbm_to_vmem [thread:$0]  %s237, 4096, %s239, %s227, 128, 128, 8
        $region32: #{tpu_custom_call.1} parent=19 // pred_fallthru
          _
      $region20: #{tpu_custom_call.1} parent=5 // pred_fallthru
        _
      %p245 = scmp.le.s32.totalorder 1, %s22
      %p246 = scmp.lt.s32.totalorder %s22, 3
      %p247 = pnand %p245, %p246
      %p248 = pneg %p247
      // Predicated region
      $region33: #{tpu_custom_call.1} parent=5 // pred_check
        _
      $region34: #{tpu_custom_call.1} parent=5 // pred_check_branch
        %250 = sbr.rel (%p247) target = $region36
      $region35: #{tpu_custom_call.1} parent=5 // pred_region
        %s251 = ssub.s32 %s22, 1
        %s252 = sand.u32 %s35, 1
        %s253 = scalar_lea.sflag [#allocation5], %s252
        %s254 = sand.u32 %s35, 1
        %s255 = smul.addr %s254, 256
        %s256 = scalar_lea.vmem [#allocation4], %s255
        // Predicated region
        $region37: #{tpu_custom_call.1} parent=35 // pred_check
          %p257 = pneg %p48
        $region38: #{tpu_custom_call.1} parent=35 // pred_check_branch
          %259 = sbr.rel (%p257) target = $region40
        $region39: #{tpu_custom_call.1} parent=35 // pred_region
          %260 = dma.done %s253, 4096
        $region40: #{tpu_custom_call.1} parent=35 // pred_fallthru
          _
        %s261 = sand.u32 %s27, 1
        %s262 = scalar_lea.sflag [#allocation8], %s261
        %s263 = sand.u32 %s61, 1
        %s264 = smul.addr %s263, 256
        %s265 = scalar_lea.vmem [#allocation7], %s264
        // Predicated region
        $region41: #{tpu_custom_call.1} parent=35 // pred_check
          %p266 = pneg %p74
        $region42: #{tpu_custom_call.1} parent=35 // pred_check_branch
          %268 = sbr.rel (%p266) target = $region44
        $region43: #{tpu_custom_call.1} parent=35 // pred_region
          %269 = dma.done %s262, 4096
        $region44: #{tpu_custom_call.1} parent=35 // pred_fallthru
          _
        %s270 = sand.u32 %s27, 1
        %s271 = scalar_lea.sflag [#allocation8], %s270
        %s272 = sand.u32 %s87, 1
        %s273 = smul.addr %s272, 256
        %s274 = scalar_lea.vmem [#allocation9], %s273
        // Predicated region
        $region45: #{tpu_custom_call.1} parent=35 // pred_check
          %p275 = pneg %p100
        $region46: #{tpu_custom_call.1} parent=35 // pred_check_branch
          %277 = sbr.rel (%p275) target = $region48
        $region47: #{tpu_custom_call.1} parent=35 // pred_region
          %278 = dma.done %s271, 4096
        $region48: #{tpu_custom_call.1} parent=35 // pred_fallthru
          _
        // Predicated region
        $region49: #{tpu_custom_call.1} parent=35 // pred_check
          %p279 = pneg %p121
        $region50: #{tpu_custom_call.1} parent=35 // pred_check_branch
          %281 = sbr.rel (%p279) target = $region52
        $region51: #{tpu_custom_call.1} parent=35 // pred_region
          %282 = dma.done [#allocation11], 2048
        $region52: #{tpu_custom_call.1} parent=35 // pred_fallthru
          _
        %s283 = sand.u32 %s35, 1
        %s284 = scalar_lea.sflag [#allocation5], %s283
        %s285 = sand.u32 %s35, 1
        %s286 = smul.addr %s285, 256
        %s287 = scalar_lea.vmem [#allocation4], %s286
        %p288 = pneg %p48
        %p289 = pneg %p45
        %s290 = sand.u32 %s27, 1
        %s291 = scalar_lea.sflag [#allocation8], %s290
        %s292 = sand.u32 %s61, 1
        %s293 = smul.addr %s292, 256
        %s294 = scalar_lea.vmem [#allocation7], %s293
        %p295 = pneg %p74
        %p296 = pneg %p71
        %s297 = sand.u32 %s27, 1
        %s298 = scalar_lea.sflag [#allocation8], %s297
        %s299 = sand.u32 %s87, 1
        %s300 = smul.addr %s299, 256
        %s301 = scalar_lea.vmem [#allocation9], %s300
        %p302 = pneg %p100
        %p303 = pneg %p97
        %p304 = pneg %p121
        %p305 = pneg %p118
        %p306 = pneg %p147
        %p307 = pneg %p144
        %s308 = sand.u32 %s134, 1
        %s309 = scalar_lea.sflag [#allocation6], %s308
        %s310 = sand.u32 %s134, 1
        %s311 = smul.addr %s310, 256
        %s312 = scalar_lea.vmem [#allocation12], %s311
        %s313 = smul.u32 2, %s27
        %s314 = smul.u32 2, %s27
        %s315 = smul.u32 2, %s27
        %s316 = smul.u32 2, %s27
        %s318 = sld [smem:[#allocation3]]
        %v319 = vld [vmem:[#allocation10] sm:$0xff]
        %v320 = vld [vmem:[#allocation10 + $0x8] sm:$0xff]
        %v321 = vld [vmem:[#allocation10 + $0x10] sm:$0xff]
        %v322 = vld [vmem:[#allocation10 + $0x18] sm:$0xff]
        %v323 = vld [vmem:[#allocation10 + $0x20] sm:$0xff]
        %v324 = vld [vmem:[#allocation10 + $0x28] sm:$0xff]
        %v325 = vld [vmem:[#allocation10 + $0x30] sm:$0xff]
        %v326 = vld [vmem:[#allocation10 + $0x38] sm:$0xff]
        %v327 = vld [vmem:[#allocation10 + $0x40] sm:$0xff]
        %v328 = vld [vmem:[#allocation10 + $0x48] sm:$0xff]
        %v329 = vld [vmem:[#allocation10 + $0x50] sm:$0xff]
        %v330 = vld [vmem:[#allocation10 + $0x58] sm:$0xff]
        %v331 = vld [vmem:[#allocation10 + $0x60] sm:$0xff]
        %v332 = vld [vmem:[#allocation10 + $0x68] sm:$0xff]
        %v333 = vld [vmem:[#allocation10 + $0x70] sm:$0xff]
        %v334 = vld [vmem:[#allocation10 + $0x78] sm:$0xff]
        %v335 = vlaneseq
        %v336 = vshrl.u32 %v335, 7
        %v337 = vadd.s32 %v336, 8
        %v338 = vadd.s32 %v336, 16
        %v339 = vadd.s32 %v336, 24
        %v340 = vadd.s32 %v336, 32
        %v341 = vadd.s32 %v336, 40
        %v342 = vadd.s32 %v336, 48
        %v343 = vadd.s32 %v336, 56
        %v344 = vadd.s32 %v336, 64
        %v345 = vadd.s32 %v336, 72
        %v346 = vadd.s32 %v336, 80
        %v347 = vadd.s32 %v336, 88
        %v348 = vadd.s32 %v336, 96
        %v349 = vadd.s32 %v336, 104
        %v350 = vadd.s32 %v336, 112
        %v351 = vadd.s32 %v336, 120
        %v352 = vlaneseq
        %v353 = vand.u32 %v352, 127
        %v354 = vmul.u32 %v336, 128
        %v355 = vmul.u32 %v337, 128
        %v356 = vmul.u32 %v338, 128
        %v357 = vmul.u32 %v339, 128
        %v358 = vmul.u32 %v340, 128
        %v359 = vmul.u32 %v341, 128
        %v360 = vmul.u32 %v342, 128
        %v361 = vmul.u32 %v343, 128
        %v362 = vmul.u32 %v344, 128
        %v363 = vmul.u32 %v345, 128
        %v364 = vmul.u32 %v346, 128
        %v365 = vmul.u32 %v347, 128
        %v366 = vmul.u32 %v348, 128
        %v367 = vmul.u32 %v349, 128
        %v368 = vmul.u32 %v350, 128
        %v369 = vmul.u32 %v351, 128
        %v370 = vadd.s32 %v354, %v353
        %v371 = vadd.s32 %v355, %v353
        %v372 = vadd.s32 %v356, %v353
        %v373 = vadd.s32 %v357, %v353
        %v374 = vadd.s32 %v358, %v353
        %v375 = vadd.s32 %v359, %v353
        %v376 = vadd.s32 %v360, %v353
        %v377 = vadd.s32 %v361, %v353
        %v378 = vadd.s32 %v362, %v353
        %v379 = vadd.s32 %v363, %v353
        %v380 = vadd.s32 %v364, %v353
        %v381 = vadd.s32 %v365, %v353
        %v382 = vadd.s32 %v366, %v353
        %v383 = vadd.s32 %v367, %v353
        %v384 = vadd.s32 %v368, %v353
        %v385 = vadd.s32 %v369, %v353
        %v386 = vand.u32 %v370, 2147483647
        %v387 = vand.u32 %v371, 2147483647
        %v388 = vand.u32 %v372, 2147483647
        %v389 = vand.u32 %v373, 2147483647
        %v390 = vand.u32 %v374, 2147483647
        %v391 = vand.u32 %v375, 2147483647
        %v392 = vand.u32 %v376, 2147483647
        %v393 = vand.u32 %v377, 2147483647
        %v394 = vand.u32 %v378, 2147483647
        %v395 = vand.u32 %v379, 2147483647
        %v396 = vand.u32 %v380, 2147483647
        %v397 = vand.u32 %v381, 2147483647
        %v398 = vand.u32 %v382, 2147483647
        %v399 = vand.u32 %v383, 2147483647
        %v400 = vand.u32 %v384, 2147483647
        %v401 = vand.u32 %v385, 2147483647
        %v402 = vld [vmem:[%s256] sm:$0xff]
        %v403 = vld [vmem:[%s256 + $0x8] sm:$0xff]
        %v404 = vld [vmem:[%s256 + $0x10] sm:$0xff]
        %v405 = vld [vmem:[%s256 + $0x18] sm:$0xff]
        %v406 = vld [vmem:[%s256 + $0x20] sm:$0xff]
        %v407 = vld [vmem:[%s256 + $0x28] sm:$0xff]
        %v408 = vld [vmem:[%s256 + $0x30] sm:$0xff]
        %v409 = vld [vmem:[%s256 + $0x38] sm:$0xff]
        %v410 = vld [vmem:[%s256 + $0x40] sm:$0xff]
        %v411 = vld [vmem:[%s256 + $0x48] sm:$0xff]
        %v412 = vld [vmem:[%s256 + $0x50] sm:$0xff]
        %v413 = vld [vmem:[%s256 + $0x58] sm:$0xff]
        %v414 = vld [vmem:[%s256 + $0x60] sm:$0xff]
        %v415 = vld [vmem:[%s256 + $0x68] sm:$0xff]
        %v416 = vld [vmem:[%s256 + $0x70] sm:$0xff]
        %v417 = vld [vmem:[%s256 + $0x78] sm:$0xff]
        %v418 = vmul.f32 %v402, 0.088388346
        %v419 = vmul.f32 %v403, 0.088388346
        %v420 = vmul.f32 %v404, 0.088388346
        %v421 = vmul.f32 %v405, 0.088388346
        %v422 = vmul.f32 %v406, 0.088388346
        %v423 = vmul.f32 %v407, 0.088388346
        %v424 = vmul.f32 %v408, 0.088388346
        %v425 = vmul.f32 %v409, 0.088388346
        %v426 = vmul.f32 %v410, 0.088388346
        %v427 = vmul.f32 %v411, 0.088388346
        %v428 = vmul.f32 %v412, 0.088388346
        %v429 = vmul.f32 %v413, 0.088388346
        %v430 = vmul.f32 %v414, 0.088388346
        %v431 = vmul.f32 %v415, 0.088388346
        %v432 = vmul.f32 %v416, 0.088388346
        %v433 = vmul.f32 %v417, 0.088388346
        %v434 = vpack.c.bf16 %v419, %v418
        %v435 = vpack.c.bf16 %v421, %v420
        %v436 = vpack.c.bf16 %v423, %v422
        %v437 = vpack.c.bf16 %v425, %v424
        %v438 = vpack.c.bf16 %v427, %v426
        %v439 = vpack.c.bf16 %v429, %v428
        %v440 = vpack.c.bf16 %v431, %v430
        %v441 = vpack.c.bf16 %v433, %v432
        %v442 = vld [vmem:[%s265] sm:$0xff]
        %v443 = vld [vmem:[%s265 + $0x8] sm:$0xff]
        %v444 = vld [vmem:[%s265 + $0x10] sm:$0xff]
        %v445 = vld [vmem:[%s265 + $0x18] sm:$0xff]
        %v446 = vld [vmem:[%s265 + $0x20] sm:$0xff]
        %v447 = vld [vmem:[%s265 + $0x28] sm:$0xff]
        %v448 = vld [vmem:[%s265 + $0x30] sm:$0xff]
        %v449 = vld [vmem:[%s265 + $0x38] sm:$0xff]
        %v450 = vld [vmem:[%s265 + $0x40] sm:$0xff]
        %v451 = vld [vmem:[%s265 + $0x48] sm:$0xff]
        %v452 = vld [vmem:[%s265 + $0x50] sm:$0xff]
        %v453 = vld [vmem:[%s265 + $0x58] sm:$0xff]
        %v454 = vld [vmem:[%s265 + $0x60] sm:$0xff]
        %v455 = vld [vmem:[%s265 + $0x68] sm:$0xff]
        %v456 = vld [vmem:[%s265 + $0x70] sm:$0xff]
        %v457 = vld [vmem:[%s265 + $0x78] sm:$0xff]
        %v458 = vpack.c.bf16 %v443, %v442
        %v459 = vpack.c.bf16 %v445, %v444
        %v460 = vpack.c.bf16 %v447, %v446
        %v461 = vpack.c.bf16 %v449, %v448
        %v462 = vpack.c.bf16 %v451, %v450
        %v463 = vpack.c.bf16 %v453, %v452
        %v464 = vpack.c.bf16 %v455, %v454
        %v465 = vpack.c.bf16 %v457, %v456
        %466 = vmatprep.subr.bf16.mxu0 0
        %467 = vmatpush1.bf16.xpose.msra.mxu0 %v465
        %468 = vmatprep.subr.bf16.mxu0 0
        %469 = vmatpush1.bf16.xpose.msra.mxu0 %v464
        %470 = vmatprep.subr.bf16.mxu0 0
        %471 = vmatpush1.bf16.xpose.msra.mxu0 %v463
        %472 = vmatprep.subr.bf16.mxu0 0
        %473 = vmatpush1.bf16.xpose.msra.mxu0 %v462
        %474 = vmatprep.subr.bf16.mxu0 0
        %475 = vmatpush1.bf16.xpose.msra.mxu0 %v461
        %476 = vmatprep.subr.bf16.mxu0 0
        %477 = vmatpush1.bf16.xpose.msra.mxu0 %v460
        %478 = vmatprep.subr.bf16.mxu0 0
        %479 = vmatpush1.bf16.xpose.msra.mxu0 %v459
        %480 = vmatprep.subr.bf16.mxu0 0
        %481 = vmatpush1.bf16.xpose.msra.mxu0 %v458
        %482 = vmatprep.subr.bf16.mxu0 0
        %483 = vmatpush2.bf16.xpose.msra.mxu0 0
        %484 = vmatprep.subr.bf16.mxu0 0
        %485 = vmatpush2.bf16.xpose.msra.mxu0 0
        %486 = vmatprep.subr.bf16.mxu0 0
        %487 = vmatpush2.bf16.xpose.msra.mxu0 0
        %488 = vmatprep.subr.bf16.mxu0 0
        %489 = vmatpush2.bf16.xpose.msra.mxu0 0
        %490 = vmatprep.subr.bf16.mxu0 0
        %491 = vmatpush2.bf16.xpose.msra.mxu0 0
        %492 = vmatprep.subr.bf16.mxu0 0
        %493 = vmatpush2.bf16.xpose.msra.mxu0 0
        %494 = vmatprep.subr.bf16.mxu0 0
        %495 = vmatpush2.bf16.xpose.msra.mxu0 0
        %496 = vmatprep.subr.bf16.mxu0 0
        %497 = vmatpush2.bf16.xpose.msra.mxu0 0
        %498 = vmatprep.mubr.bf16.mxu0 0
        %499 = vmatmul.mubr.bf16.gmra.mxu0 %v434
        %v500 = vpop.f32.mrf.mxu0
        %v501 = vadd.f32 %v319, %v500
        %v502 = vpop.f32.mrf.mxu0
        %v503 = vpop.f32.mrf.mxu0
        %v504 = vadd.f32 %v320, %v503
        %v505 = vpop.f32.mrf.mxu0
        %506 = vmatprep.mubr.bf16.mxu0 0
        %507 = vmatmul.mubr.bf16.gmra.mxu0 %v435
        %v508 = vpop.f32.mrf.mxu0
        %v509 = vadd.f32 %v321, %v508
        %v510 = vpop.f32.mrf.mxu0
        %v511 = vpop.f32.mrf.mxu0
        %v512 = vadd.f32 %v322, %v511
        %v513 = vpop.f32.mrf.mxu0
        %514 = vmatprep.mubr.bf16.mxu0 0
        %515 = vmatmul.mubr.bf16.gmra.mxu0 %v436
        %v516 = vpop.f32.mrf.mxu0
        %v517 = vadd.f32 %v323, %v516
        %v518 = vpop.f32.mrf.mxu0
        %v519 = vpop.f32.mrf.mxu0
        %v520 = vadd.f32 %v324, %v519
        %v521 = vpop.f32.mrf.mxu0
        %522 = vmatprep.mubr.bf16.mxu0 0
        %523 = vmatmul.mubr.bf16.gmra.mxu0 %v437
        %v524 = vpop.f32.mrf.mxu0
        %v525 = vadd.f32 %v325, %v524
        %v526 = vpop.f32.mrf.mxu0
        %v527 = vpop.f32.mrf.mxu0
        %v528 = vadd.f32 %v326, %v527
        %v529 = vpop.f32.mrf.mxu0
        %530 = vmatprep.mubr.bf16.mxu0 0
        %531 = vmatmul.mubr.bf16.gmra.mxu0 %v438
        %v532 = vpop.f32.mrf.mxu0
        %v533 = vadd.f32 %v327, %v532
        %v534 = vpop.f32.mrf.mxu0
        %v535 = vpop.f32.mrf.mxu0
        %v536 = vadd.f32 %v328, %v535
        %v537 = vpop.f32.mrf.mxu0
        %538 = vmatprep.mubr.bf16.mxu0 0
        %539 = vmatmul.mubr.bf16.gmra.mxu0 %v439
        %v540 = vpop.f32.mrf.mxu0
        %v541 = vadd.f32 %v329, %v540
        %v542 = vpop.f32.mrf.mxu0
        %v543 = vpop.f32.mrf.mxu0
        %v544 = vadd.f32 %v330, %v543
        %v545 = vpop.f32.mrf.mxu0
        %546 = vmatprep.mubr.bf16.mxu0 0
        %547 = vmatmul.mubr.bf16.gmra.mxu0 %v440
        %v548 = vpop.f32.mrf.mxu0
        %v549 = vadd.f32 %v331, %v548
        %v550 = vpop.f32.mrf.mxu0
        %v551 = vpop.f32.mrf.mxu0
        %v552 = vadd.f32 %v332, %v551
        %v553 = vpop.f32.mrf.mxu0
        %554 = vmatprep.mubr.bf16.mxu0 0
        %555 = vmatmul.mubr.bf16.gmra.mxu0 %v441
        %v556 = vpop.f32.mrf.mxu0
        %v557 = vadd.f32 %v333, %v556
        %v558 = vpop.f32.mrf.mxu0
        %v559 = vpop.f32.mrf.mxu0
        %v560 = vadd.f32 %v334, %v559
        %v561 = vpop.f32.mrf.mxu0
        %562 = vdwg.mxu0
        %563 = vmax.xlane.f32.xlu0 %v501
        %v564 = vpop.xlane.xlu0 %563
        %565 = vmax.xlane.f32.xlu0 %v504
        %v566 = vpop.xlane.xlu0 %565
        %567 = vmax.xlane.f32.xlu0 %v509
        %v568 = vpop.xlane.xlu0 %567
        %569 = vmax.xlane.f32.xlu0 %v512
        %v570 = vpop.xlane.xlu0 %569
        %571 = vmax.xlane.f32.xlu0 %v517
        %v572 = vpop.xlane.xlu0 %571
        %573 = vmax.xlane.f32.xlu0 %v520
        %v574 = vpop.xlane.xlu0 %573
        %575 = vmax.xlane.f32.xlu0 %v525
        %v576 = vpop.xlane.xlu0 %575
        %577 = vmax.xlane.f32.xlu0 %v528
        %v578 = vpop.xlane.xlu0 %577
        %579 = vmax.xlane.f32.xlu0 %v533
        %v580 = vpop.xlane.xlu0 %579
        %581 = vmax.xlane.f32.xlu0 %v536
        %v582 = vpop.xlane.xlu0 %581
        %583 = vmax.xlane.f32.xlu0 %v541
        %v584 = vpop.xlane.xlu0 %583
        %585 = vmax.xlane.f32.xlu0 %v544
        %v586 = vpop.xlane.xlu0 %585
        %587 = vmax.xlane.f32.xlu0 %v549
        %v588 = vpop.xlane.xlu0 %587
        %589 = vmax.xlane.f32.xlu0 %v552
        %v590 = vpop.xlane.xlu0 %589
        %591 = vmax.xlane.f32.xlu0 %v557
        %v592 = vpop.xlane.xlu0 %591
        %593 = vmax.xlane.f32.xlu0 %v560
        %v594 = vpop.xlane.xlu0 %593
        %v595 = vsub.f32 %v501, %v564
        %v596 = vsub.f32 %v504, %v566
        %v597 = vsub.f32 %v509, %v568
        %v598 = vsub.f32 %v512, %v570
        %v599 = vsub.f32 %v517, %v572
        %v600 = vsub.f32 %v520, %v574
        %v601 = vsub.f32 %v525, %v576
        %v602 = vsub.f32 %v528, %v578
        %v603 = vsub.f32 %v533, %v580
        %v604 = vsub.f32 %v536, %v582
        %v605 = vsub.f32 %v541, %v584
        %v606 = vsub.f32 %v544, %v586
        %v607 = vsub.f32 %v549, %v588
        %v608 = vsub.f32 %v552, %v590
        %v609 = vsub.f32 %v557, %v592
        %v610 = vsub.f32 %v560, %v594
        %v611 = vmul.f32 %v595, 1.442695
        %v612 = vpow.pop %v611
        %v613 = vmul.f32 %v596, 1.442695
        %v614 = vpow.pop %v613
        %v615 = vmul.f32 %v597, 1.442695
        %v616 = vpow.pop %v615
        %v617 = vmul.f32 %v598, 1.442695
        %v618 = vpow.pop %v617
        %v619 = vmul.f32 %v599, 1.442695
        %v620 = vpow.pop %v619
        %v621 = vmul.f32 %v600, 1.442695
        %v622 = vpow.pop %v621
        %v623 = vmul.f32 %v601, 1.442695
        %v624 = vpow.pop %v623
        %v625 = vmul.f32 %v602, 1.442695
        %v626 = vpow.pop %v625
        %v627 = vmul.f32 %v603, 1.442695
        %v628 = vpow.pop %v627
        %v629 = vmul.f32 %v604, 1.442695
        %v630 = vpow.pop %v629
        %v631 = vmul.f32 %v605, 1.442695
        %v632 = vpow.pop %v631
        %v633 = vmul.f32 %v606, 1.442695
        %v634 = vpow.pop %v633
        %v635 = vmul.f32 %v607, 1.442695
        %v636 = vpow.pop %v635
        %v637 = vmul.f32 %v608, 1.442695
        %v638 = vpow.pop %v637
        %v639 = vmul.f32 %v609, 1.442695
        %v640 = vpow.pop %v639
        %v641 = vmul.f32 %v610, 1.442695
        %v642 = vpow.pop %v641
        %643 = vadd.xlane.f32.xlu0 %v612
        %v644 = vpop.xlane.xlu0 %643
        %645 = vadd.xlane.f32.xlu0 %v614
        %v646 = vpop.xlane.xlu0 %645
        %647 = vadd.xlane.f32.xlu0 %v616
        %v648 = vpop.xlane.xlu0 %647
        %649 = vadd.xlane.f32.xlu0 %v618
        %v650 = vpop.xlane.xlu0 %649
        %651 = vadd.xlane.f32.xlu0 %v620
        %v652 = vpop.xlane.xlu0 %651
        %653 = vadd.xlane.f32.xlu0 %v622
        %v654 = vpop.xlane.xlu0 %653
        %655 = vadd.xlane.f32.xlu0 %v624
        %v656 = vpop.xlane.xlu0 %655
        %657 = vadd.xlane.f32.xlu0 %v626
        %v658 = vpop.xlane.xlu0 %657
        %659 = vadd.xlane.f32.xlu0 %v628
        %v660 = vpop.xlane.xlu0 %659
        %661 = vadd.xlane.f32.xlu0 %v630
        %v662 = vpop.xlane.xlu0 %661
        %663 = vadd.xlane.f32.xlu0 %v632
        %v664 = vpop.xlane.xlu0 %663
        %665 = vadd.xlane.f32.xlu0 %v634
        %v666 = vpop.xlane.xlu0 %665
        %667 = vadd.xlane.f32.xlu0 %v636
        %v668 = vpop.xlane.xlu0 %667
        %669 = vadd.xlane.f32.xlu0 %v638
        %v670 = vpop.xlane.xlu0 %669
        %671 = vadd.xlane.f32.xlu0 %v640
        %v672 = vpop.xlane.xlu0 %671
        %673 = vadd.xlane.f32.xlu0 %v642
        %v674 = vpop.xlane.xlu0 %673
        %s675 = smul.u32 %s27, 2027808446
        %s676 = sadd.s32 %s675, %s318
        %s677 = sand.u32 %s676, 2147483647
        %s678 = sshra.s32 %s677, 16
        %s679 = sxor.u32 %s677, %s678
        %s680 = smul.u32 %s679, 2146121005
        %s681 = sand.u32 %s680, 2147483647
        %s682 = sshra.s32 %s681, 15
        %s683 = sxor.u32 %s681, %s682
        %s684 = smul.u32 %s683, 2221713035
        %s685 = sand.u32 %s684, 2147483647
        %s686 = sshra.s32 %s685, 16
        %s687 = sxor.u32 %s685, %s686
        %s688 = sand.u32 %s687, 2147483647
        %v689 = vstv %s688
        %v690 = vxor.u32 %v386, %v689
        %v691 = vxor.u32 %v387, %v689
        %v692 = vxor.u32 %v388, %v689
        %v693 = vxor.u32 %v389, %v689
        %v694 = vxor.u32 %v390, %v689
        %v695 = vxor.u32 %v391, %v689
        %v696 = vxor.u32 %v392, %v689
        %v697 = vxor.u32 %v393, %v689
        %v698 = vxor.u32 %v394, %v689
        %v699 = vxor.u32 %v395, %v689
        %v700 = vxor.u32 %v396, %v689
        %v701 = vxor.u32 %v397, %v689
        %v702 = vxor.u32 %v398, %v689
        %v703 = vxor.u32 %v399, %v689
        %v704 = vxor.u32 %v400, %v689
        %v705 = vxor.u32 %v401, %v689
        %v706 = vand.u32 %v690, 2147483647
        %v707 = vand.u32 %v691, 2147483647
        %v708 = vand.u32 %v692, 2147483647
        %v709 = vand.u32 %v693, 2147483647
        %v710 = vand.u32 %v694, 2147483647
        %v711 = vand.u32 %v695, 2147483647
        %v712 = vand.u32 %v696, 2147483647
        %v713 = vand.u32 %v697, 2147483647
        %v714 = vand.u32 %v698, 2147483647
        %v715 = vand.u32 %v699, 2147483647
        %v716 = vand.u32 %v700, 2147483647
        %v717 = vand.u32 %v701, 2147483647
        %v718 = vand.u32 %v702, 2147483647
        %v719 = vand.u32 %v703, 2147483647
        %v720 = vand.u32 %v704, 2147483647
        %v721 = vand.u32 %v705, 2147483647
        %v722 = vshra.s32 %v706, 16
        %v723 = vshra.s32 %v707, 16
        %v724 = vshra.s32 %v708, 16
        %v725 = vshra.s32 %v709, 16
        %v726 = vshra.s32 %v710, 16
        %v727 = vshra.s32 %v711, 16
        %v728 = vshra.s32 %v712, 16
        %v729 = vshra.s32 %v713, 16
        %v730 = vshra.s32 %v714, 16
        %v731 = vshra.s32 %v715, 16
        %v732 = vshra.s32 %v716, 16
        %v733 = vshra.s32 %v717, 16
        %v734 = vshra.s32 %v718, 16
        %v735 = vshra.s32 %v719, 16
        %v736 = vshra.s32 %v720, 16
        %v737 = vshra.s32 %v721, 16
        %v738 = vxor.u32 %v706, %v722
        %v739 = vxor.u32 %v707, %v723
        %v740 = vxor.u32 %v708, %v724
        %v741 = vxor.u32 %v709, %v725
        %v742 = vxor.u32 %v710, %v726
        %v743 = vxor.u32 %v711, %v727
        %v744 = vxor.u32 %v712, %v728
        %v745 = vxor.u32 %v713, %v729
        %v746 = vxor.u32 %v714, %v730
        %v747 = vxor.u32 %v715, %v731
        %v748 = vxor.u32 %v716, %v732
        %v749 = vxor.u32 %v717, %v733
        %v750 = vxor.u32 %v718, %v734
        %v751 = vxor.u32 %v719, %v735
        %v752 = vxor.u32 %v720, %v736
        %v753 = vxor.u32 %v721, %v737
        %v754 = vmul.u32 %v738, 2146121005
        %v755 = vmul.u32 %v739, 2146121005
        %v756 = vmul.u32 %v740, 2146121005
        %v757 = vmul.u32 %v741, 2146121005
        %v758 = vmul.u32 %v742, 2146121005
        %v759 = vmul.u32 %v743, 2146121005
        %v760 = vmul.u32 %v744, 2146121005
        %v761 = vmul.u32 %v745, 2146121005
        %v762 = vmul.u32 %v746, 2146121005
        %v763 = vmul.u32 %v747, 2146121005
        %v764 = vmul.u32 %v748, 2146121005
        %v765 = vmul.u32 %v749, 2146121005
        %v766 = vmul.u32 %v750, 2146121005
        %v767 = vmul.u32 %v751, 2146121005
        %v768 = vmul.u32 %v752, 2146121005
        %v769 = vmul.u32 %v753, 2146121005
        %v770 = vand.u32 %v754, 2147483647
        %v771 = vand.u32 %v755, 2147483647
        %v772 = vand.u32 %v756, 2147483647
        %v773 = vand.u32 %v757, 2147483647
        %v774 = vand.u32 %v758, 2147483647
        %v775 = vand.u32 %v759, 2147483647
        %v776 = vand.u32 %v760, 2147483647
        %v777 = vand.u32 %v761, 2147483647
        %v778 = vand.u32 %v762, 2147483647
        %v779 = vand.u32 %v763, 2147483647
        %v780 = vand.u32 %v764, 2147483647
        %v781 = vand.u32 %v765, 2147483647
        %v782 = vand.u32 %v766, 2147483647
        %v783 = vand.u32 %v767, 2147483647
        %v784 = vand.u32 %v768, 2147483647
        %v785 = vand.u32 %v769, 2147483647
        %v786 = vshra.s32 %v770, 15
        %v787 = vshra.s32 %v771, 15
        %v788 = vshra.s32 %v772, 15
        %v789 = vshra.s32 %v773, 15
        %v790 = vshra.s32 %v774, 15
        %v791 = vshra.s32 %v775, 15
        %v792 = vshra.s32 %v776, 15
        %v793 = vshra.s32 %v777, 15
        %v794 = vshra.s32 %v778, 15
        %v795 = vshra.s32 %v779, 15
        %v796 = vshra.s32 %v780, 15
        %v797 = vshra.s32 %v781, 15
        %v798 = vshra.s32 %v782, 15
        %v799 = vshra.s32 %v783, 15
        %v800 = vshra.s32 %v784, 15
        %v801 = vshra.s32 %v785, 15
        %v802 = vxor.u32 %v770, %v786
        %v803 = vxor.u32 %v771, %v787
        %v804 = vxor.u32 %v772, %v788
        %v805 = vxor.u32 %v773, %v789
        %v806 = vxor.u32 %v774, %v790
        %v807 = vxor.u32 %v775, %v791
        %v808 = vxor.u32 %v776, %v792
        %v809 = vxor.u32 %v777, %v793
        %v810 = vxor.u32 %v778, %v794
        %v811 = vxor.u32 %v779, %v795
        %v812 = vxor.u32 %v780, %v796
        %v813 = vxor.u32 %v781, %v797
        %v814 = vxor.u32 %v782, %v798
        %v815 = vxor.u32 %v783, %v799
        %v816 = vxor.u32 %v784, %v800
        %v817 = vxor.u32 %v785, %v801
        %v818 = vmul.u32 %v802, 2221713035
        %v819 = vmul.u32 %v803, 2221713035
        %v820 = vmul.u32 %v804, 2221713035
        %v821 = vmul.u32 %v805, 2221713035
        %v822 = vmul.u32 %v806, 2221713035
        %v823 = vmul.u32 %v807, 2221713035
        %v824 = vmul.u32 %v808, 2221713035
        %v825 = vmul.u32 %v809, 2221713035
        %v826 = vmul.u32 %v810, 2221713035
        %v827 = vmul.u32 %v811, 2221713035
        %v828 = vmul.u32 %v812, 2221713035
        %v829 = vmul.u32 %v813, 2221713035
        %v830 = vmul.u32 %v814, 2221713035
        %v831 = vmul.u32 %v815, 2221713035
        %v832 = vmul.u32 %v816, 2221713035
        %v833 = vmul.u32 %v817, 2221713035
        %v834 = vand.u32 %v818, 2147483647
        %v835 = vand.u32 %v819, 2147483647
        %v836 = vand.u32 %v820, 2147483647
        %v837 = vand.u32 %v821, 2147483647
        %v838 = vand.u32 %v822, 2147483647
        %v839 = vand.u32 %v823, 2147483647
        %v840 = vand.u32 %v824, 2147483647
        %v841 = vand.u32 %v825, 2147483647
        %v842 = vand.u32 %v826, 2147483647
        %v843 = vand.u32 %v827, 2147483647
        %v844 = vand.u32 %v828, 2147483647
        %v845 = vand.u32 %v829, 2147483647
        %v846 = vand.u32 %v830, 2147483647
        %v847 = vand.u32 %v831, 2147483647
        %v848 = vand.u32 %v832, 2147483647
        %v849 = vand.u32 %v833, 2147483647
        %v850 = vshra.s32 %v834, 16
        %v851 = vshra.s32 %v835, 16
        %v852 = vshra.s32 %v836, 16
        %v853 = vshra.s32 %v837, 16
        %v854 = vshra.s32 %v838, 16
        %v855 = vshra.s32 %v839, 16
        %v856 = vshra.s32 %v840, 16
        %v857 = vshra.s32 %v841, 16
        %v858 = vshra.s32 %v842, 16
        %v859 = vshra.s32 %v843, 16
        %v860 = vshra.s32 %v844, 16
        %v861 = vshra.s32 %v845, 16
        %v862 = vshra.s32 %v846, 16
        %v863 = vshra.s32 %v847, 16
        %v864 = vshra.s32 %v848, 16
        %v865 = vshra.s32 %v849, 16
        %v866 = vxor.u32 %v834, %v850
        %v867 = vxor.u32 %v835, %v851
        %v868 = vxor.u32 %v836, %v852
        %v869 = vxor.u32 %v837, %v853
        %v870 = vxor.u32 %v838, %v854
        %v871 = vxor.u32 %v839, %v855
        %v872 = vxor.u32 %v840, %v856
        %v873 = vxor.u32 %v841, %v857
        %v874 = vxor.u32 %v842, %v858
        %v875 = vxor.u32 %v843, %v859
        %v876 = vxor.u32 %v844, %v860
        %v877 = vxor.u32 %v845, %v861
        %v878 = vxor.u32 %v846, %v862
        %v879 = vxor.u32 %v847, %v863
        %v880 = vxor.u32 %v848, %v864
        %v881 = vxor.u32 %v849, %v865
        %v882 = vand.u32 %v866, 2147483647
        %v883 = vand.u32 %v867, 2147483647
        %v884 = vand.u32 %v868, 2147483647
        %v885 = vand.u32 %v869, 2147483647
        %v886 = vand.u32 %v870, 2147483647
        %v887 = vand.u32 %v871, 2147483647
        %v888 = vand.u32 %v872, 2147483647
        %v889 = vand.u32 %v873, 2147483647
        %v890 = vand.u32 %v874, 2147483647
        %v891 = vand.u32 %v875, 2147483647
        %v892 = vand.u32 %v876, 2147483647
        %v893 = vand.u32 %v877, 2147483647
        %v894 = vand.u32 %v878, 2147483647
        %v895 = vand.u32 %v879, 2147483647
        %v896 = vand.u32 %v880, 2147483647
        %v897 = vand.u32 %v881, 2147483647
        %vm898 = vcmp.ge.s32.totalorder %v882, 214748365
        %vm899 = vcmp.ge.s32.totalorder %v883, 214748365
        %vm900 = vcmp.ge.s32.totalorder %v884, 214748365
        %vm901 = vcmp.ge.s32.totalorder %v885, 214748365
        %vm902 = vcmp.ge.s32.totalorder %v886, 214748365
        %vm903 = vcmp.ge.s32.totalorder %v887, 214748365
        %vm904 = vcmp.ge.s32.totalorder %v888, 214748365
        %vm905 = vcmp.ge.s32.totalorder %v889, 214748365
        %vm906 = vcmp.ge.s32.totalorder %v890, 214748365
        %vm907 = vcmp.ge.s32.totalorder %v891, 214748365
        %vm908 = vcmp.ge.s32.totalorder %v892, 214748365
        %vm909 = vcmp.ge.s32.totalorder %v893, 214748365
        %vm910 = vcmp.ge.s32.totalorder %v894, 214748365
        %vm911 = vcmp.ge.s32.totalorder %v895, 214748365
        %vm912 = vcmp.ge.s32.totalorder %v896, 214748365
        %vm913 = vcmp.ge.s32.totalorder %v897, 214748365
        %v914 = vrcp.pop %v644
        %v915 = vmul.f32 1.1111112, %v914
        %v916 = vrcp.pop %v646
        %v917 = vmul.f32 1.1111112, %v916
        %v918 = vrcp.pop %v648
        %v919 = vmul.f32 1.1111112, %v918
        %v920 = vrcp.pop %v650
        %v921 = vmul.f32 1.1111112, %v920
        %v922 = vrcp.pop %v652
        %v923 = vmul.f32 1.1111112, %v922
        %v924 = vrcp.pop %v654
        %v925 = vmul.f32 1.1111112, %v924
        %v926 = vrcp.pop %v656
        %v927 = vmul.f32 1.1111112, %v926
        %v928 = vrcp.pop %v658
        %v929 = vmul.f32 1.1111112, %v928
        %v930 = vrcp.pop %v660
        %v931 = vmul.f32 1.1111112, %v930
        %v932 = vrcp.pop %v662
        %v933 = vmul.f32 1.1111112, %v932
        %v934 = vrcp.pop %v664
        %v935 = vmul.f32 1.1111112, %v934
        %v936 = vrcp.pop %v666
        %v937 = vmul.f32 1.1111112, %v936
        %v938 = vrcp.pop %v668
        %v939 = vmul.f32 1.1111112, %v938
        %v940 = vrcp.pop %v670
        %v941 = vmul.f32 1.1111112, %v940
        %v942 = vrcp.pop %v672
        %v943 = vmul.f32 1.1111112, %v942
        %v944 = vrcp.pop %v674
        %v945 = vmul.f32 1.1111112, %v944
        %v946 = vmul.f32 %v612, %v915
        %v947 = vmul.f32 %v614, %v917
        %v948 = vmul.f32 %v616, %v919
        %v949 = vmul.f32 %v618, %v921
        %v950 = vmul.f32 %v620, %v923
        %v951 = vmul.f32 %v622, %v925
        %v952 = vmul.f32 %v624, %v927
        %v953 = vmul.f32 %v626, %v929
        %v954 = vmul.f32 %v628, %v931
        %v955 = vmul.f32 %v630, %v933
        %v956 = vmul.f32 %v632, %v935
        %v957 = vmul.f32 %v634, %v937
        %v958 = vmul.f32 %v636, %v939
        %v959 = vmul.f32 %v638, %v941
        %v960 = vmul.f32 %v640, %v943
        %v961 = vmul.f32 %v642, %v945
        %v962 = vsel %vm898, %v946, 0.0
        %v963 = vsel %vm899, %v947, 0.0
        %v964 = vsel %vm900, %v948, 0.0
        %v965 = vsel %vm901, %v949, 0.0
        %v966 = vsel %vm902, %v950, 0.0
        %v967 = vsel %vm903, %v951, 0.0
        %v968 = vsel %vm904, %v952, 0.0
        %v969 = vsel %vm905, %v953, 0.0
        %v970 = vsel %vm906, %v954, 0.0
        %v971 = vsel %vm907, %v955, 0.0
        %v972 = vsel %vm908, %v956, 0.0
        %v973 = vsel %vm909, %v957, 0.0
        %v974 = vsel %vm910, %v958, 0.0
        %v975 = vsel %vm911, %v959, 0.0
        %v976 = vsel %vm912, %v960, 0.0
        %v977 = vsel %vm913, %v961, 0.0
        %v978 = vpack.c.bf16 %v963, %v962
        %v979 = vpack.c.bf16 %v965, %v964
        %v980 = vpack.c.bf16 %v967, %v966
        %v981 = vpack.c.bf16 %v969, %v968
        %v982 = vpack.c.bf16 %v971, %v970
        %v983 = vpack.c.bf16 %v973, %v972
        %v984 = vpack.c.bf16 %v975, %v974
        %v985 = vpack.c.bf16 %v977, %v976
        %v986 = vld [vmem:[%s274] sm:$0xff]
        %v987 = vld [vmem:[%s274 + $0x8] sm:$0xff]
        %v988 = vld [vmem:[%s274 + $0x10] sm:$0xff]
        %v989 = vld [vmem:[%s274 + $0x18] sm:$0xff]
        %v990 = vld [vmem:[%s274 + $0x20] sm:$0xff]
        %v991 = vld [vmem:[%s274 + $0x28] sm:$0xff]
        %v992 = vld [vmem:[%s274 + $0x30] sm:$0xff]
        %v993 = vld [vmem:[%s274 + $0x38] sm:$0xff]
        %v994 = vld [vmem:[%s274 + $0x40] sm:$0xff]
        %v995 = vld [vmem:[%s274 + $0x48] sm:$0xff]
        %v996 = vld [vmem:[%s274 + $0x50] sm:$0xff]
        %v997 = vld [vmem:[%s274 + $0x58] sm:$0xff]
        %v998 = vld [vmem:[%s274 + $0x60] sm:$0xff]
        %v999 = vld [vmem:[%s274 + $0x68] sm:$0xff]
        %v1000 = vld [vmem:[%s274 + $0x70] sm:$0xff]
        %v1001 = vld [vmem:[%s274 + $0x78] sm:$0xff]
        %v1002 = vpack.c.bf16 %v987, %v986
        %v1003 = vpack.c.bf16 %v989, %v988
        %v1004 = vpack.c.bf16 %v991, %v990
        %v1005 = vpack.c.bf16 %v993, %v992
        %v1006 = vpack.c.bf16 %v995, %v994
        %v1007 = vpack.c.bf16 %v997, %v996
        %v1008 = vpack.c.bf16 %v999, %v998
        %v1009 = vpack.c.bf16 %v1001, %v1000
        %1010 = vmatprep.subr.bf16.mxu0 0
        %1011 = vmatpush1.bf16.msra.mxu0 %v1009
        %1012 = vmatprep.subr.bf16.mxu0 0
        %1013 = vmatpush1.bf16.msra.mxu0 %v1008
        %1014 = vmatprep.subr.bf16.mxu0 0
        %1015 = vmatpush1.bf16.msra.mxu0 %v1007
        %1016 = vmatprep.subr.bf16.mxu0 0
        %1017 = vmatpush1.bf16.msra.mxu0 %v1006
        %1018 = vmatprep.subr.bf16.mxu0 0
        %1019 = vmatpush1.bf16.msra.mxu0 %v1005
        %1020 = vmatprep.subr.bf16.mxu0 0
        %1021 = vmatpush1.bf16.msra.mxu0 %v1004
        %1022 = vmatprep.subr.bf16.mxu0 0
        %1023 = vmatpush1.bf16.msra.mxu0 %v1003
        %1024 = vmatprep.subr.bf16.mxu0 0
        %1025 = vmatpush1.bf16.msra.mxu0 %v1002
        %1026 = vmatprep.subr.bf16.mxu0 0
        %1027 = vmatpush2.bf16.msra.mxu0 0
        %1028 = vmatprep.subr.bf16.mxu0 0
        %1029 = vmatpush2.bf16.msra.mxu0 0
        %1030 = vmatprep.subr.bf16.mxu0 0
        %1031 = vmatpush2.bf16.msra.mxu0 0
        %1032 = vmatprep.subr.bf16.mxu0 0
        %1033 = vmatpush2.bf16.msra.mxu0 0
        %1034 = vmatprep.subr.bf16.mxu0 0
        %1035 = vmatpush2.bf16.msra.mxu0 0
        %1036 = vmatprep.subr.bf16.mxu0 0
        %1037 = vmatpush2.bf16.msra.mxu0 0
        %1038 = vmatprep.subr.bf16.mxu0 0
        %1039 = vmatpush2.bf16.msra.mxu0 0
        %1040 = vmatprep.subr.bf16.mxu0 0
        %1041 = vmatpush2.bf16.msra.mxu0 0
        %1042 = vmatprep.mubr.bf16.mxu0 0
        %1043 = vmatmul.mubr.bf16.gmra.mxu0 %v978
        %v1044 = vpop.f32.mrf.mxu0
        %v1045 = vadd.f32 0.0, %v1044
        %v1046 = vpop.f32.mrf.mxu0
        %v1047 = vpop.f32.mrf.mxu0
        %v1048 = vadd.f32 0.0, %v1047
        %v1049 = vpop.f32.mrf.mxu0
        %1050 = vmatprep.mubr.bf16.mxu0 0
        %1051 = vmatmul.mubr.bf16.gmra.mxu0 %v979
        %v1052 = vpop.f32.mrf.mxu0
        %v1053 = vadd.f32 0.0, %v1052
        %v1054 = vpop.f32.mrf.mxu0
        %v1055 = vpop.f32.mrf.mxu0
        %v1056 = vadd.f32 0.0, %v1055
        %v1057 = vpop.f32.mrf.mxu0
        %1058 = vmatprep.mubr.bf16.mxu0 0
        %1059 = vmatmul.mubr.bf16.gmra.mxu0 %v980
        %v1060 = vpop.f32.mrf.mxu0
        %v1061 = vadd.f32 0.0, %v1060
        %v1062 = vpop.f32.mrf.mxu0
        %v1063 = vpop.f32.mrf.mxu0
        %v1064 = vadd.f32 0.0, %v1063
        %v1065 = vpop.f32.mrf.mxu0
        %1066 = vmatprep.mubr.bf16.mxu0 0
        %1067 = vmatmul.mubr.bf16.gmra.mxu0 %v981
        %v1068 = vpop.f32.mrf.mxu0
        %v1069 = vadd.f32 0.0, %v1068
        %v1070 = vpop.f32.mrf.mxu0
        %v1071 = vpop.f32.mrf.mxu0
        %v1072 = vadd.f32 0.0, %v1071
        %v1073 = vpop.f32.mrf.mxu0
        %1074 = vmatprep.mubr.bf16.mxu0 0
        %1075 = vmatmul.mubr.bf16.gmra.mxu0 %v982
        %v1076 = vpop.f32.mrf.mxu0
        %v1077 = vadd.f32 0.0, %v1076
        %v1078 = vpop.f32.mrf.mxu0
        %v1079 = vpop.f32.mrf.mxu0
        %v1080 = vadd.f32 0.0, %v1079
        %v1081 = vpop.f32.mrf.mxu0
        %1082 = vmatprep.mubr.bf16.mxu0 0
        %1083 = vmatmul.mubr.bf16.gmra.mxu0 %v983
        %v1084 = vpop.f32.mrf.mxu0
        %v1085 = vadd.f32 0.0, %v1084
        %v1086 = vpop.f32.mrf.mxu0
        %v1087 = vpop.f32.mrf.mxu0
        %v1088 = vadd.f32 0.0, %v1087
        %v1089 = vpop.f32.mrf.mxu0
        %1090 = vmatprep.mubr.bf16.mxu0 0
        %1091 = vmatmul.mubr.bf16.gmra.mxu0 %v984
        %v1092 = vpop.f32.mrf.mxu0
        %v1093 = vadd.f32 0.0, %v1092
        %v1094 = vpop.f32.mrf.mxu0
        %v1095 = vpop.f32.mrf.mxu0
        %v1096 = vadd.f32 0.0, %v1095
        %v1097 = vpop.f32.mrf.mxu0
        %1098 = vmatprep.mubr.bf16.mxu0 0
        %1099 = vmatmul.mubr.bf16.gmra.mxu0 %v985
        %v1100 = vpop.f32.mrf.mxu0
        %v1101 = vadd.f32 0.0, %v1100
        %v1102 = vpop.f32.mrf.mxu0
        %v1103 = vpop.f32.mrf.mxu0
        %v1104 = vadd.f32 0.0, %v1103
        %v1105 = vpop.f32.mrf.mxu0
        %1106 = vdwg.mxu0
        %1107 = vst [vmem:[%s312] sm:$0xff] %v1045
        %1108 = vst [vmem:[%s312 + $0x8] sm:$0xff] %v1048
        %1109 = vst [vmem:[%s312 + $0x10] sm:$0xff] %v1053
        %1110 = vst [vmem:[%s312 + $0x18] sm:$0xff] %v1056
        %1111 = vst [vmem:[%s312 + $0x20] sm:$0xff] %v1061
        %1112 = vst [vmem:[%s312 + $0x28] sm:$0xff] %v1064
        %1113 = vst [vmem:[%s312 + $0x30] sm:$0xff] %v1069
        %1114 = vst [vmem:[%s312 + $0x38] sm:$0xff] %v1072
        %1115 = vst [vmem:[%s312 + $0x40] sm:$0xff] %v1077
        %1116 = vst [vmem:[%s312 + $0x48] sm:$0xff] %v1080
        %1117 = vst [vmem:[%s312 + $0x50] sm:$0xff] %v1085
        %1118 = vst [vmem:[%s312 + $0x58] sm:$0xff] %v1088
        %1119 = vst [vmem:[%s312 + $0x60] sm:$0xff] %v1093
        %1120 = vst [vmem:[%s312 + $0x68] sm:$0xff] %v1096
        %1121 = vst [vmem:[%s312 + $0x70] sm:$0xff] %v1101
        %1122 = vst [vmem:[%s312 + $0x78] sm:$0xff] %v1104
        %s1123 = scalar_lea.vmem %s256, 128 [#allocation4]
        %v1124 = vld [vmem:[%s1123] sm:$0xff]
        %v1125 = vld [vmem:[%s1123 + $0x8] sm:$0xff]
        %v1126 = vld [vmem:[%s1123 + $0x10] sm:$0xff]
        %v1127 = vld [vmem:[%s1123 + $0x18] sm:$0xff]
        %v1128 = vld [vmem:[%s1123 + $0x20] sm:$0xff]
        %v1129 = vld [vmem:[%s1123 + $0x28] sm:$0xff]
        %v1130 = vld [vmem:[%s1123 + $0x30] sm:$0xff]
        %v1131 = vld [vmem:[%s1123 + $0x38] sm:$0xff]
        %v1132 = vld [vmem:[%s1123 + $0x40] sm:$0xff]
        %v1133 = vld [vmem:[%s1123 + $0x48] sm:$0xff]
        %v1134 = vld [vmem:[%s1123 + $0x50] sm:$0xff]
        %v1135 = vld [vmem:[%s1123 + $0x58] sm:$0xff]
        %v1136 = vld [vmem:[%s1123 + $0x60] sm:$0xff]
        %v1137 = vld [vmem:[%s1123 + $0x68] sm:$0xff]
        %v1138 = vld [vmem:[%s1123 + $0x70] sm:$0xff]
        %v1139 = vld [vmem:[%s1123 + $0x78] sm:$0xff]
        %v1140 = vmul.f32 %v1124, 0.088388346
        %v1141 = vmul.f32 %v1125, 0.088388346
        %v1142 = vmul.f32 %v1126, 0.088388346
        %v1143 = vmul.f32 %v1127, 0.088388346
        %v1144 = vmul.f32 %v1128, 0.088388346
        %v1145 = vmul.f32 %v1129, 0.088388346
        %v1146 = vmul.f32 %v1130, 0.088388346
        %v1147 = vmul.f32 %v1131, 0.088388346
        %v1148 = vmul.f32 %v1132, 0.088388346
        %v1149 = vmul.f32 %v1133, 0.088388346
        %v1150 = vmul.f32 %v1134, 0.088388346
        %v1151 = vmul.f32 %v1135, 0.088388346
        %v1152 = vmul.f32 %v1136, 0.088388346
        %v1153 = vmul.f32 %v1137, 0.088388346
        %v1154 = vmul.f32 %v1138, 0.088388346
        %v1155 = vmul.f32 %v1139, 0.088388346
        %v1156 = vpack.c.bf16 %v1141, %v1140
        %v1157 = vpack.c.bf16 %v1143, %v1142
        %v1158 = vpack.c.bf16 %v1145, %v1144
        %v1159 = vpack.c.bf16 %v1147, %v1146
        %v1160 = vpack.c.bf16 %v1149, %v1148
        %v1161 = vpack.c.bf16 %v1151, %v1150
        %v1162 = vpack.c.bf16 %v1153, %v1152
        %v1163 = vpack.c.bf16 %v1155, %v1154
        %s1164 = scalar_lea.vmem %s265, 128 [#allocation7]
        %v1165 = vld [vmem:[%s1164] sm:$0xff]
        %v1166 = vld [vmem:[%s1164 + $0x8] sm:$0xff]
        %v1167 = vld [vmem:[%s1164 + $0x10] sm:$0xff]
        %v1168 = vld [vmem:[%s1164 + $0x18] sm:$0xff]
        %v1169 = vld [vmem:[%s1164 + $0x20] sm:$0xff]
        %v1170 = vld [vmem:[%s1164 + $0x28] sm:$0xff]
        %v1171 = vld [vmem:[%s1164 + $0x30] sm:$0xff]
        %v1172 = vld [vmem:[%s1164 + $0x38] sm:$0xff]
        %v1173 = vld [vmem:[%s1164 + $0x40] sm:$0xff]
        %v1174 = vld [vmem:[%s1164 + $0x48] sm:$0xff]
        %v1175 = vld [vmem:[%s1164 + $0x50] sm:$0xff]
        %v1176 = vld [vmem:[%s1164 + $0x58] sm:$0xff]
        %v1177 = vld [vmem:[%s1164 + $0x60] sm:$0xff]
        %v1178 = vld [vmem:[%s1164 + $0x68] sm:$0xff]
        %v1179 = vld [vmem:[%s1164 + $0x70] sm:$0xff]
        %v1180 = vld [vmem:[%s1164 + $0x78] sm:$0xff]
        %v1181 = vpack.c.bf16 %v1166, %v1165
        %v1182 = vpack.c.bf16 %v1168, %v1167
        %v1183 = vpack.c.bf16 %v1170, %v1169
        %v1184 = vpack.c.bf16 %v1172, %v1171
        %v1185 = vpack.c.bf16 %v1174, %v1173
        %v1186 = vpack.c.bf16 %v1176, %v1175
        %v1187 = vpack.c.bf16 %v1178, %v1177
        %v1188 = vpack.c.bf16 %v1180, %v1179
        %1189 = vmatprep.subr.bf16.mxu0 0
        %1190 = vmatpush1.bf16.xpose.msra.mxu0 %v1188
        %1191 = vmatprep.subr.bf16.mxu0 0
        %1192 = vmatpush1.bf16.xpose.msra.mxu0 %v1187
        %1193 = vmatprep.subr.bf16.mxu0 0
        %1194 = vmatpush1.bf16.xpose.msra.mxu0 %v1186
        %1195 = vmatprep.subr.bf16.mxu0 0
        %1196 = vmatpush1.bf16.xpose.msra.mxu0 %v1185
        %1197 = vmatprep.subr.bf16.mxu0 0
        %1198 = vmatpush1.bf16.xpose.msra.mxu0 %v1184
        %1199 = vmatprep.subr.bf16.mxu0 0
        %1200 = vmatpush1.bf16.xpose.msra.mxu0 %v1183
        %1201 = vmatprep.subr.bf16.mxu0 0
        %1202 = vmatpush1.bf16.xpose.msra.mxu0 %v1182
        %1203 = vmatprep.subr.bf16.mxu0 0
        %1204 = vmatpush1.bf16.xpose.msra.mxu0 %v1181
        %1205 = vmatprep.subr.bf16.mxu0 0
        %1206 = vmatpush2.bf16.xpose.msra.mxu0 0
        %1207 = vmatprep.subr.bf16.mxu0 0
        %1208 = vmatpush2.bf16.xpose.msra.mxu0 0
        %1209 = vmatprep.subr.bf16.mxu0 0
        %1210 = vmatpush2.bf16.xpose.msra.mxu0 0
        %1211 = vmatprep.subr.bf16.mxu0 0
        %1212 = vmatpush2.bf16.xpose.msra.mxu0 0
        %1213 = vmatprep.subr.bf16.mxu0 0
        %1214 = vmatpush2.bf16.xpose.msra.mxu0 0
        %1215 = vmatprep.subr.bf16.mxu0 0
        %1216 = vmatpush2.bf16.xpose.msra.mxu0 0
        %1217 = vmatprep.subr.bf16.mxu0 0
        %1218 = vmatpush2.bf16.xpose.msra.mxu0 0
        %1219 = vmatprep.subr.bf16.mxu0 0
        %1220 = vmatpush2.bf16.xpose.msra.mxu0 0
        %1221 = vmatprep.mubr.bf16.mxu0 0
        %1222 = vmatmul.mubr.bf16.gmra.mxu0 %v1156
        %v1223 = vpop.f32.mrf.mxu0
        %v1224 = vadd.f32 %v319, %v1223
        %v1225 = vpop.f32.mrf.mxu0
        %v1226 = vpop.f32.mrf.mxu0
        %v1227 = vadd.f32 %v320, %v1226
        %v1228 = vpop.f32.mrf.mxu0
        %1229 = vmatprep.mubr.bf16.mxu0 0
        %1230 = vmatmul.mubr.bf16.gmra.mxu0 %v1157
        %v1231 = vpop.f32.mrf.mxu0
        %v1232 = vadd.f32 %v321, %v1231
        %v1233 = vpop.f32.mrf.mxu0
        %v1234 = vpop.f32.mrf.mxu0
        %v1235 = vadd.f32 %v322, %v1234
        %v1236 = vpop.f32.mrf.mxu0
        %1237 = vmatprep.mubr.bf16.mxu0 0
        %1238 = vmatmul.mubr.bf16.gmra.mxu0 %v1158
        %v1239 = vpop.f32.mrf.mxu0
        %v1240 = vadd.f32 %v323, %v1239
        %v1241 = vpop.f32.mrf.mxu0
        %v1242 = vpop.f32.mrf.mxu0
        %v1243 = vadd.f32 %v324, %v1242
        %v1244 = vpop.f32.mrf.mxu0
        %1245 = vmatprep.mubr.bf16.mxu0 0
        %1246 = vmatmul.mubr.bf16.gmra.mxu0 %v1159
        %v1247 = vpop.f32.mrf.mxu0
        %v1248 = vadd.f32 %v325, %v1247
        %v1249 = vpop.f32.mrf.mxu0
        %v1250 = vpop.f32.mrf.mxu0
        %v1251 = vadd.f32 %v326, %v1250
        %v1252 = vpop.f32.mrf.mxu0
        %1253 = vmatprep.mubr.bf16.mxu0 0
        %1254 = vmatmul.mubr.bf16.gmra.mxu0 %v1160
        %v1255 = vpop.f32.mrf.mxu0
        %v1256 = vadd.f32 %v327, %v1255
        %v1257 = vpop.f32.mrf.mxu0
        %v1258 = vpop.f32.mrf.mxu0
        %v1259 = vadd.f32 %v328, %v1258
        %v1260 = vpop.f32.mrf.mxu0
        %1261 = vmatprep.mubr.bf16.mxu0 0
        %1262 = vmatmul.mubr.bf16.gmra.mxu0 %v1161
        %v1263 = vpop.f32.mrf.mxu0
        %v1264 = vadd.f32 %v329, %v1263
        %v1265 = vpop.f32.mrf.mxu0
        %v1266 = vpop.f32.mrf.mxu0
        %v1267 = vadd.f32 %v330, %v1266
        %v1268 = vpop.f32.mrf.mxu0
        %1269 = vmatprep.mubr.bf16.mxu0 0
        %1270 = vmatmul.mubr.bf16.gmra.mxu0 %v1162
        %v1271 = vpop.f32.mrf.mxu0
        %v1272 = vadd.f32 %v331, %v1271
        %v1273 = vpop.f32.mrf.mxu0
        %v1274 = vpop.f32.mrf.mxu0
        %v1275 = vadd.f32 %v332, %v1274
        %v1276 = vpop.f32.mrf.mxu0
        %1277 = vmatprep.mubr.bf16.mxu0 0
        %1278 = vmatmul.mubr.bf16.gmra.mxu0 %v1163
        %v1279 = vpop.f32.mrf.mxu0
        %v1280 = vadd.f32 %v333, %v1279
        %v1281 = vpop.f32.mrf.mxu0
        %v1282 = vpop.f32.mrf.mxu0
        %v1283 = vadd.f32 %v334, %v1282
        %v1284 = vpop.f32.mrf.mxu0
        %1285 = vdwg.mxu0
        %1286 = vmax.xlane.f32.xlu0 %v1224
        %v1287 = vpop.xlane.xlu0 %1286
        %1288 = vmax.xlane.f32.xlu0 %v1227
        %v1289 = vpop.xlane.xlu0 %1288
        %1290 = vmax.xlane.f32.xlu0 %v1232
        %v1291 = vpop.xlane.xlu0 %1290
        %1292 = vmax.xlane.f32.xlu0 %v1235
        %v1293 = vpop.xlane.xlu0 %1292
        %1294 = vmax.xlane.f32.xlu0 %v1240
        %v1295 = vpop.xlane.xlu0 %1294
        %1296 = vmax.xlane.f32.xlu0 %v1243
        %v1297 = vpop.xlane.xlu0 %1296
        %1298 = vmax.xlane.f32.xlu0 %v1248
        %v1299 = vpop.xlane.xlu0 %1298
        %1300 = vmax.xlane.f32.xlu0 %v1251
        %v1301 = vpop.xlane.xlu0 %1300
        %1302 = vmax.xlane.f32.xlu0 %v1256
        %v1303 = vpop.xlane.xlu0 %1302
        %1304 = vmax.xlane.f32.xlu0 %v1259
        %v1305 = vpop.xlane.xlu0 %1304
        %1306 = vmax.xlane.f32.xlu0 %v1264
        %v1307 = vpop.xlane.xlu0 %1306
        %1308 = vmax.xlane.f32.xlu0 %v1267
        %v1309 = vpop.xlane.xlu0 %1308
        %1310 = vmax.xlane.f32.xlu0 %v1272
        %v1311 = vpop.xlane.xlu0 %1310
        %1312 = vmax.xlane.f32.xlu0 %v1275
        %v1313 = vpop.xlane.xlu0 %1312
        %1314 = vmax.xlane.f32.xlu0 %v1280
        %v1315 = vpop.xlane.xlu0 %1314
        %1316 = vmax.xlane.f32.xlu0 %v1283
        %v1317 = vpop.xlane.xlu0 %1316
        %v1318 = vsub.f32 %v1224, %v1287
        %v1319 = vsub.f32 %v1227, %v1289
        %v1320 = vsub.f32 %v1232, %v1291
        %v1321 = vsub.f32 %v1235, %v1293
        %v1322 = vsub.f32 %v1240, %v1295
        %v1323 = vsub.f32 %v1243, %v1297
        %v1324 = vsub.f32 %v1248, %v1299
        %v1325 = vsub.f32 %v1251, %v1301
        %v1326 = vsub.f32 %v1256, %v1303
        %v1327 = vsub.f32 %v1259, %v1305
        %v1328 = vsub.f32 %v1264, %v1307
        %v1329 = vsub.f32 %v1267, %v1309
        %v1330 = vsub.f32 %v1272, %v1311
        %v1331 = vsub.f32 %v1275, %v1313
        %v1332 = vsub.f32 %v1280, %v1315
        %v1333 = vsub.f32 %v1283, %v1317
        %v1334 = vmul.f32 %v1318, 1.442695
        %v1335 = vpow.pop %v1334
        %v1336 = vmul.f32 %v1319, 1.442695
        %v1337 = vpow.pop %v1336
        %v1338 = vmul.f32 %v1320, 1.442695
        %v1339 = vpow.pop %v1338
        %v1340 = vmul.f32 %v1321, 1.442695
        %v1341 = vpow.pop %v1340
        %v1342 = vmul.f32 %v1322, 1.442695
        %v1343 = vpow.pop %v1342
        %v1344 = vmul.f32 %v1323, 1.442695
        %v1345 = vpow.pop %v1344
        %v1346 = vmul.f32 %v1324, 1.442695
        %v1347 = vpow.pop %v1346
        %v1348 = vmul.f32 %v1325, 1.442695
        %v1349 = vpow.pop %v1348
        %v1350 = vmul.f32 %v1326, 1.442695
        %v1351 = vpow.pop %v1350
        %v1352 = vmul.f32 %v1327, 1.442695
        %v1353 = vpow.pop %v1352
        %v1354 = vmul.f32 %v1328, 1.442695
        %v1355 = vpow.pop %v1354
        %v1356 = vmul.f32 %v1329, 1.442695
        %v1357 = vpow.pop %v1356
        %v1358 = vmul.f32 %v1330, 1.442695
        %v1359 = vpow.pop %v1358
        %v1360 = vmul.f32 %v1331, 1.442695
        %v1361 = vpow.pop %v1360
        %v1362 = vmul.f32 %v1332, 1.442695
        %v1363 = vpow.pop %v1362
        %v1364 = vmul.f32 %v1333, 1.442695
        %v1365 = vpow.pop %v1364
        %1366 = vadd.xlane.f32.xlu0 %v1335
        %v1367 = vpop.xlane.xlu0 %1366
        %1368 = vadd.xlane.f32.xlu0 %v1337
        %v1369 = vpop.xlane.xlu0 %1368
        %1370 = vadd.xlane.f32.xlu0 %v1339
        %v1371 = vpop.xlane.xlu0 %1370
        %1372 = vadd.xlane.f32.xlu0 %v1341
        %v1373 = vpop.xlane.xlu0 %1372
        %1374 = vadd.xlane.f32.xlu0 %v1343
        %v1375 = vpop.xlane.xlu0 %1374
        %1376 = vadd.xlane.f32.xlu0 %v1345
        %v1377 = vpop.xlane.xlu0 %1376
        %1378 = vadd.xlane.f32.xlu0 %v1347
        %v1379 = vpop.xlane.xlu0 %1378
        %1380 = vadd.xlane.f32.xlu0 %v1349
        %v1381 = vpop.xlane.xlu0 %1380
        %1382 = vadd.xlane.f32.xlu0 %v1351
        %v1383 = vpop.xlane.xlu0 %1382
        %1384 = vadd.xlane.f32.xlu0 %v1353
        %v1385 = vpop.xlane.xlu0 %1384
        %1386 = vadd.xlane.f32.xlu0 %v1355
        %v1387 = vpop.xlane.xlu0 %1386
        %1388 = vadd.xlane.f32.xlu0 %v1357
        %v1389 = vpop.xlane.xlu0 %1388
        %1390 = vadd.xlane.f32.xlu0 %v1359
        %v1391 = vpop.xlane.xlu0 %1390
        %1392 = vadd.xlane.f32.xlu0 %v1361
        %v1393 = vpop.xlane.xlu0 %1392
        %1394 = vadd.xlane.f32.xlu0 %v1363
        %v1395 = vpop.xlane.xlu0 %1394
        %1396 = vadd.xlane.f32.xlu0 %v1365
        %v1397 = vpop.xlane.xlu0 %1396
        %s1398 = smul.u32 %s27, 2
        %s1399 = sadd.s32 %s1398, 1
        %s1400 = smul.u32 %s1399, 1013904223
        %s1401 = sadd.s32 %s1400, %s318
        %s1402 = sand.u32 %s1401, 2147483647
        %s1403 = sshra.s32 %s1402, 16
        %s1404 = sxor.u32 %s1402, %s1403
        %s1405 = smul.u32 %s1404, 2146121005
        %s1406 = sand.u32 %s1405, 2147483647
        %s1407 = sshra.s32 %s1406, 15
        %s1408 = sxor.u32 %s1406, %s1407
        %s1409 = smul.u32 %s1408, 2221713035
        %s1410 = sand.u32 %s1409, 2147483647
        %s1411 = sshra.s32 %s1410, 16
        %s1412 = sxor.u32 %s1410, %s1411
        %s1413 = sand.u32 %s1412, 2147483647
        %v1414 = vstv %s1413
        %v1415 = vxor.u32 %v386, %v1414
        %v1416 = vxor.u32 %v387, %v1414
        %v1417 = vxor.u32 %v388, %v1414
        %v1418 = vxor.u32 %v389, %v1414
        %v1419 = vxor.u32 %v390, %v1414
        %v1420 = vxor.u32 %v391, %v1414
        %v1421 = vxor.u32 %v392, %v1414
        %v1422 = vxor.u32 %v393, %v1414
        %v1423 = vxor.u32 %v394, %v1414
        %v1424 = vxor.u32 %v395, %v1414
        %v1425 = vxor.u32 %v396, %v1414
        %v1426 = vxor.u32 %v397, %v1414
        %v1427 = vxor.u32 %v398, %v1414
        %v1428 = vxor.u32 %v399, %v1414
        %v1429 = vxor.u32 %v400, %v1414
        %v1430 = vxor.u32 %v401, %v1414
        %v1431 = vand.u32 %v1415, 2147483647
        %v1432 = vand.u32 %v1416, 2147483647
        %v1433 = vand.u32 %v1417, 2147483647
        %v1434 = vand.u32 %v1418, 2147483647
        %v1435 = vand.u32 %v1419, 2147483647
        %v1436 = vand.u32 %v1420, 2147483647
        %v1437 = vand.u32 %v1421, 2147483647
        %v1438 = vand.u32 %v1422, 2147483647
        %v1439 = vand.u32 %v1423, 2147483647
        %v1440 = vand.u32 %v1424, 2147483647
        %v1441 = vand.u32 %v1425, 2147483647
        %v1442 = vand.u32 %v1426, 2147483647
        %v1443 = vand.u32 %v1427, 2147483647
        %v1444 = vand.u32 %v1428, 2147483647
        %v1445 = vand.u32 %v1429, 2147483647
        %v1446 = vand.u32 %v1430, 2147483647
        %v1447 = vshra.s32 %v1431, 16
        %v1448 = vshra.s32 %v1432, 16
        %v1449 = vshra.s32 %v1433, 16
        %v1450 = vshra.s32 %v1434, 16
        %v1451 = vshra.s32 %v1435, 16
        %v1452 = vshra.s32 %v1436, 16
        %v1453 = vshra.s32 %v1437, 16
        %v1454 = vshra.s32 %v1438, 16
        %v1455 = vshra.s32 %v1439, 16
        %v1456 = vshra.s32 %v1440, 16
        %v1457 = vshra.s32 %v1441, 16
        %v1458 = vshra.s32 %v1442, 16
        %v1459 = vshra.s32 %v1443, 16
        %v1460 = vshra.s32 %v1444, 16
        %v1461 = vshra.s32 %v1445, 16
        %v1462 = vshra.s32 %v1446, 16
        %v1463 = vxor.u32 %v1431, %v1447
        %v1464 = vxor.u32 %v1432, %v1448
        %v1465 = vxor.u32 %v1433, %v1449
        %v1466 = vxor.u32 %v1434, %v1450
        %v1467 = vxor.u32 %v1435, %v1451
        %v1468 = vxor.u32 %v1436, %v1452
        %v1469 = vxor.u32 %v1437, %v1453
        %v1470 = vxor.u32 %v1438, %v1454
        %v1471 = vxor.u32 %v1439, %v1455
        %v1472 = vxor.u32 %v1440, %v1456
        %v1473 = vxor.u32 %v1441, %v1457
        %v1474 = vxor.u32 %v1442, %v1458
        %v1475 = vxor.u32 %v1443, %v1459
        %v1476 = vxor.u32 %v1444, %v1460
        %v1477 = vxor.u32 %v1445, %v1461
        %v1478 = vxor.u32 %v1446, %v1462
        %v1479 = vmul.u32 %v1463, 2146121005
        %v1480 = vmul.u32 %v1464, 2146121005
        %v1481 = vmul.u32 %v1465, 2146121005
        %v1482 = vmul.u32 %v1466, 2146121005
        %v1483 = vmul.u32 %v1467, 2146121005
        %v1484 = vmul.u32 %v1468, 2146121005
        %v1485 = vmul.u32 %v1469, 2146121005
        %v1486 = vmul.u32 %v1470, 2146121005
        %v1487 = vmul.u32 %v1471, 2146121005
        %v1488 = vmul.u32 %v1472, 2146121005
        %v1489 = vmul.u32 %v1473, 2146121005
        %v1490 = vmul.u32 %v1474, 2146121005
        %v1491 = vmul.u32 %v1475, 2146121005
        %v1492 = vmul.u32 %v1476, 2146121005
        %v1493 = vmul.u32 %v1477, 2146121005
        %v1494 = vmul.u32 %v1478, 2146121005
        %v1495 = vand.u32 %v1479, 2147483647
        %v1496 = vand.u32 %v1480, 2147483647
        %v1497 = vand.u32 %v1481, 2147483647
        %v1498 = vand.u32 %v1482, 2147483647
        %v1499 = vand.u32 %v1483, 2147483647
        %v1500 = vand.u32 %v1484, 2147483647
        %v1501 = vand.u32 %v1485, 2147483647
        %v1502 = vand.u32 %v1486, 2147483647
        %v1503 = vand.u32 %v1487, 2147483647
        %v1504 = vand.u32 %v1488, 2147483647
        %v1505 = vand.u32 %v1489, 2147483647
        %v1506 = vand.u32 %v1490, 2147483647
        %v1507 = vand.u32 %v1491, 2147483647
        %v1508 = vand.u32 %v1492, 2147483647
        %v1509 = vand.u32 %v1493, 2147483647
        %v1510 = vand.u32 %v1494, 2147483647
        %v1511 = vshra.s32 %v1495, 15
        %v1512 = vshra.s32 %v1496, 15
        %v1513 = vshra.s32 %v1497, 15
        %v1514 = vshra.s32 %v1498, 15
        %v1515 = vshra.s32 %v1499, 15
        %v1516 = vshra.s32 %v1500, 15
        %v1517 = vshra.s32 %v1501, 15
        %v1518 = vshra.s32 %v1502, 15
        %v1519 = vshra.s32 %v1503, 15
        %v1520 = vshra.s32 %v1504, 15
        %v1521 = vshra.s32 %v1505, 15
        %v1522 = vshra.s32 %v1506, 15
        %v1523 = vshra.s32 %v1507, 15
        %v1524 = vshra.s32 %v1508, 15
        %v1525 = vshra.s32 %v1509, 15
        %v1526 = vshra.s32 %v1510, 15
        %v1527 = vxor.u32 %v1495, %v1511
        %v1528 = vxor.u32 %v1496, %v1512
        %v1529 = vxor.u32 %v1497, %v1513
        %v1530 = vxor.u32 %v1498, %v1514
        %v1531 = vxor.u32 %v1499, %v1515
        %v1532 = vxor.u32 %v1500, %v1516
        %v1533 = vxor.u32 %v1501, %v1517
        %v1534 = vxor.u32 %v1502, %v1518
        %v1535 = vxor.u32 %v1503, %v1519
        %v1536 = vxor.u32 %v1504, %v1520
        %v1537 = vxor.u32 %v1505, %v1521
        %v1538 = vxor.u32 %v1506, %v1522
        %v1539 = vxor.u32 %v1507, %v1523
        %v1540 = vxor.u32 %v1508, %v1524
        %v1541 = vxor.u32 %v1509, %v1525
        %v1542 = vxor.u32 %v1510, %v1526
        %v1543 = vmul.u32 %v1527, 2221713035
        %v1544 = vmul.u32 %v1528, 2221713035
        %v1545 = vmul.u32 %v1529, 2221713035
        %v1546 = vmul.u32 %v1530, 2221713035
        %v1547 = vmul.u32 %v1531, 2221713035
        %v1548 = vmul.u32 %v1532, 2221713035
        %v1549 = vmul.u32 %v1533, 2221713035
        %v1550 = vmul.u32 %v1534, 2221713035
        %v1551 = vmul.u32 %v1535, 2221713035
        %v1552 = vmul.u32 %v1536, 2221713035
        %v1553 = vmul.u32 %v1537, 2221713035
        %v1554 = vmul.u32 %v1538, 2221713035
        %v1555 = vmul.u32 %v1539, 2221713035
        %v1556 = vmul.u32 %v1540, 2221713035
        %v1557 = vmul.u32 %v1541, 2221713035
        %v1558 = vmul.u32 %v1542, 2221713035
        %v1559 = vand.u32 %v1543, 2147483647
        %v1560 = vand.u32 %v1544, 2147483647
        %v1561 = vand.u32 %v1545, 2147483647
        %v1562 = vand.u32 %v1546, 2147483647
        %v1563 = vand.u32 %v1547, 2147483647
        %v1564 = vand.u32 %v1548, 2147483647
        %v1565 = vand.u32 %v1549, 2147483647
        %v1566 = vand.u32 %v1550, 2147483647
        %v1567 = vand.u32 %v1551, 2147483647
        %v1568 = vand.u32 %v1552, 2147483647
        %v1569 = vand.u32 %v1553, 2147483647
        %v1570 = vand.u32 %v1554, 2147483647
        %v1571 = vand.u32 %v1555, 2147483647
        %v1572 = vand.u32 %v1556, 2147483647
        %v1573 = vand.u32 %v1557, 2147483647
        %v1574 = vand.u32 %v1558, 2147483647
        %v1575 = vshra.s32 %v1559, 16
        %v1576 = vshra.s32 %v1560, 16
        %v1577 = vshra.s32 %v1561, 16
        %v1578 = vshra.s32 %v1562, 16
        %v1579 = vshra.s32 %v1563, 16
        %v1580 = vshra.s32 %v1564, 16
        %v1581 = vshra.s32 %v1565, 16
        %v1582 = vshra.s32 %v1566, 16
        %v1583 = vshra.s32 %v1567, 16
        %v1584 = vshra.s32 %v1568, 16
        %v1585 = vshra.s32 %v1569, 16
        %v1586 = vshra.s32 %v1570, 16
        %v1587 = vshra.s32 %v1571, 16
        %v1588 = vshra.s32 %v1572, 16
        %v1589 = vshra.s32 %v1573, 16
        %v1590 = vshra.s32 %v1574, 16
        %v1591 = vxor.u32 %v1559, %v1575
        %v1592 = vxor.u32 %v1560, %v1576
        %v1593 = vxor.u32 %v1561, %v1577
        %v1594 = vxor.u32 %v1562, %v1578
        %v1595 = vxor.u32 %v1563, %v1579
        %v1596 = vxor.u32 %v1564, %v1580
        %v1597 = vxor.u32 %v1565, %v1581
        %v1598 = vxor.u32 %v1566, %v1582
        %v1599 = vxor.u32 %v1567, %v1583
        %v1600 = vxor.u32 %v1568, %v1584
        %v1601 = vxor.u32 %v1569, %v1585
        %v1602 = vxor.u32 %v1570, %v1586
        %v1603 = vxor.u32 %v1571, %v1587
        %v1604 = vxor.u32 %v1572, %v1588
        %v1605 = vxor.u32 %v1573, %v1589
        %v1606 = vxor.u32 %v1574, %v1590
        %v1607 = vand.u32 %v1591, 2147483647
        %v1608 = vand.u32 %v1592, 2147483647
        %v1609 = vand.u32 %v1593, 2147483647
        %v1610 = vand.u32 %v1594, 2147483647
        %v1611 = vand.u32 %v1595, 2147483647
        %v1612 = vand.u32 %v1596, 2147483647
        %v1613 = vand.u32 %v1597, 2147483647
        %v1614 = vand.u32 %v1598, 2147483647
        %v1615 = vand.u32 %v1599, 2147483647
        %v1616 = vand.u32 %v1600, 2147483647
        %v1617 = vand.u32 %v1601, 2147483647
        %v1618 = vand.u32 %v1602, 2147483647
        %v1619 = vand.u32 %v1603, 2147483647
        %v1620 = vand.u32 %v1604, 2147483647
        %v1621 = vand.u32 %v1605, 2147483647
        %v1622 = vand.u32 %v1606, 2147483647
        %vm1623 = vcmp.ge.s32.totalorder %v1607, 214748365
        %vm1624 = vcmp.ge.s32.totalorder %v1608, 214748365
        %vm1625 = vcmp.ge.s32.totalorder %v1609, 214748365
        %vm1626 = vcmp.ge.s32.totalorder %v1610, 214748365
        %vm1627 = vcmp.ge.s32.totalorder %v1611, 214748365
        %vm1628 = vcmp.ge.s32.totalorder %v1612, 214748365
        %vm1629 = vcmp.ge.s32.totalorder %v1613, 214748365
        %vm1630 = vcmp.ge.s32.totalorder %v1614, 214748365
        %vm1631 = vcmp.ge.s32.totalorder %v1615, 214748365
        %vm1632 = vcmp.ge.s32.totalorder %v1616, 214748365
        %vm1633 = vcmp.ge.s32.totalorder %v1617, 214748365
        %vm1634 = vcmp.ge.s32.totalorder %v1618, 214748365
        %vm1635 = vcmp.ge.s32.totalorder %v1619, 214748365
        %vm1636 = vcmp.ge.s32.totalorder %v1620, 214748365
        %vm1637 = vcmp.ge.s32.totalorder %v1621, 214748365
        %vm1638 = vcmp.ge.s32.totalorder %v1622, 214748365
        %v1639 = vrcp.pop %v1367
        %v1640 = vmul.f32 1.1111112, %v1639
        %v1641 = vrcp.pop %v1369
        %v1642 = vmul.f32 1.1111112, %v1641
        %v1643 = vrcp.pop %v1371
        %v1644 = vmul.f32 1.1111112, %v1643
        %v1645 = vrcp.pop %v1373
        %v1646 = vmul.f32 1.1111112, %v1645
        %v1647 = vrcp.pop %v1375
        %v1648 = vmul.f32 1.1111112, %v1647
        %v1649 = vrcp.pop %v1377
        %v1650 = vmul.f32 1.1111112, %v1649
        %v1651 = vrcp.pop %v1379
        %v1652 = vmul.f32 1.1111112, %v1651
        %v1653 = vrcp.pop %v1381
        %v1654 = vmul.f32 1.1111112, %v1653
        %v1655 = vrcp.pop %v1383
        %v1656 = vmul.f32 1.1111112, %v1655
        %v1657 = vrcp.pop %v1385
        %v1658 = vmul.f32 1.1111112, %v1657
        %v1659 = vrcp.pop %v1387
        %v1660 = vmul.f32 1.1111112, %v1659
        %v1661 = vrcp.pop %v1389
        %v1662 = vmul.f32 1.1111112, %v1661
        %v1663 = vrcp.pop %v1391
        %v1664 = vmul.f32 1.1111112, %v1663
        %v1665 = vrcp.pop %v1393
        %v1666 = vmul.f32 1.1111112, %v1665
        %v1667 = vrcp.pop %v1395
        %v1668 = vmul.f32 1.1111112, %v1667
        %v1669 = vrcp.pop %v1397
        %v1670 = vmul.f32 1.1111112, %v1669
        %v1671 = vmul.f32 %v1335, %v1640
        %v1672 = vmul.f32 %v1337, %v1642
        %v1673 = vmul.f32 %v1339, %v1644
        %v1674 = vmul.f32 %v1341, %v1646
        %v1675 = vmul.f32 %v1343, %v1648
        %v1676 = vmul.f32 %v1345, %v1650
        %v1677 = vmul.f32 %v1347, %v1652
        %v1678 = vmul.f32 %v1349, %v1654
        %v1679 = vmul.f32 %v1351, %v1656
        %v1680 = vmul.f32 %v1353, %v1658
        %v1681 = vmul.f32 %v1355, %v1660
        %v1682 = vmul.f32 %v1357, %v1662
        %v1683 = vmul.f32 %v1359, %v1664
        %v1684 = vmul.f32 %v1361, %v1666
        %v1685 = vmul.f32 %v1363, %v1668
        %v1686 = vmul.f32 %v1365, %v1670
        %v1687 = vsel %vm1623, %v1671, 0.0
        %v1688 = vsel %vm1624, %v1672, 0.0
        %v1689 = vsel %vm1625, %v1673, 0.0
        %v1690 = vsel %vm1626, %v1674, 0.0
        %v1691 = vsel %vm1627, %v1675, 0.0
        %v1692 = vsel %vm1628, %v1676, 0.0
        %v1693 = vsel %vm1629, %v1677, 0.0
        %v1694 = vsel %vm1630, %v1678, 0.0
        %v1695 = vsel %vm1631, %v1679, 0.0
        %v1696 = vsel %vm1632, %v1680, 0.0
        %v1697 = vsel %vm1633, %v1681, 0.0
        %v1698 = vsel %vm1634, %v1682, 0.0
        %v1699 = vsel %vm1635, %v1683, 0.0
        %v1700 = vsel %vm1636, %v1684, 0.0
        %v1701 = vsel %vm1637, %v1685, 0.0
        %v1702 = vsel %vm1638, %v1686, 0.0
        %v1703 = vpack.c.bf16 %v1688, %v1687
        %v1704 = vpack.c.bf16 %v1690, %v1689
        %v1705 = vpack.c.bf16 %v1692, %v1691
        %v1706 = vpack.c.bf16 %v1694, %v1693
        %v1707 = vpack.c.bf16 %v1696, %v1695
        %v1708 = vpack.c.bf16 %v1698, %v1697
        %v1709 = vpack.c.bf16 %v1700, %v1699
        %v1710 = vpack.c.bf16 %v1702, %v1701
        %s1711 = scalar_lea.vmem %s274, 128 [#allocation9]
        %v1712 = vld [vmem:[%s1711] sm:$0xff]
        %v1713 = vld [vmem:[%s1711 + $0x8] sm:$0xff]
        %v1714 = vld [vmem:[%s1711 + $0x10] sm:$0xff]
        %v1715 = vld [vmem:[%s1711 + $0x18] sm:$0xff]
        %v1716 = vld [vmem:[%s1711 + $0x20] sm:$0xff]
        %v1717 = vld [vmem:[%s1711 + $0x28] sm:$0xff]
        %v1718 = vld [vmem:[%s1711 + $0x30] sm:$0xff]
        %v1719 = vld [vmem:[%s1711 + $0x38] sm:$0xff]
        %v1720 = vld [vmem:[%s1711 + $0x40] sm:$0xff]
        %v1721 = vld [vmem:[%s1711 + $0x48] sm:$0xff]
        %v1722 = vld [vmem:[%s1711 + $0x50] sm:$0xff]
        %v1723 = vld [vmem:[%s1711 + $0x58] sm:$0xff]
        %v1724 = vld [vmem:[%s1711 + $0x60] sm:$0xff]
        %v1725 = vld [vmem:[%s1711 + $0x68] sm:$0xff]
        %v1726 = vld [vmem:[%s1711 + $0x70] sm:$0xff]
        %v1727 = vld [vmem:[%s1711 + $0x78] sm:$0xff]
        %v1728 = vpack.c.bf16 %v1713, %v1712
        %v1729 = vpack.c.bf16 %v1715, %v1714
        %v1730 = vpack.c.bf16 %v1717, %v1716
        %v1731 = vpack.c.bf16 %v1719, %v1718
        %v1732 = vpack.c.bf16 %v1721, %v1720
        %v1733 = vpack.c.bf16 %v1723, %v1722
        %v1734 = vpack.c.bf16 %v1725, %v1724
        %v1735 = vpack.c.bf16 %v1727, %v1726
        %1736 = vmatprep.subr.bf16.mxu0 0
        %1737 = vmatpush1.bf16.msra.mxu0 %v1735
        %1738 = vmatprep.subr.bf16.mxu0 0
        %1739 = vmatpush1.bf16.msra.mxu0 %v1734
        %1740 = vmatprep.subr.bf16.mxu0 0
        %1741 = vmatpush1.bf16.msra.mxu0 %v1733
        %1742 = vmatprep.subr.bf16.mxu0 0
        %1743 = vmatpush1.bf16.msra.mxu0 %v1732
        %1744 = vmatprep.subr.bf16.mxu0 0
        %1745 = vmatpush1.bf16.msra.mxu0 %v1731
        %1746 = vmatprep.subr.bf16.mxu0 0
        %1747 = vmatpush1.bf16.msra.mxu0 %v1730
        %1748 = vmatprep.subr.bf16.mxu0 0
        %1749 = vmatpush1.bf16.msra.mxu0 %v1729
        %1750 = vmatprep.subr.bf16.mxu0 0
        %1751 = vmatpush1.bf16.msra.mxu0 %v1728
        %1752 = vmatprep.subr.bf16.mxu0 0
        %1753 = vmatpush2.bf16.msra.mxu0 0
        %1754 = vmatprep.subr.bf16.mxu0 0
        %1755 = vmatpush2.bf16.msra.mxu0 0
        %1756 = vmatprep.subr.bf16.mxu0 0
        %1757 = vmatpush2.bf16.msra.mxu0 0
        %1758 = vmatprep.subr.bf16.mxu0 0
        %1759 = vmatpush2.bf16.msra.mxu0 0
        %1760 = vmatprep.subr.bf16.mxu0 0
        %1761 = vmatpush2.bf16.msra.mxu0 0
        %1762 = vmatprep.subr.bf16.mxu0 0
        %1763 = vmatpush2.bf16.msra.mxu0 0
        %1764 = vmatprep.subr.bf16.mxu0 0
        %1765 = vmatpush2.bf16.msra.mxu0 0
        %1766 = vmatprep.subr.bf16.mxu0 0
        %1767 = vmatpush2.bf16.msra.mxu0 0
        %1768 = vmatprep.mubr.bf16.mxu0 0
        %1769 = vmatmul.mubr.bf16.gmra.mxu0 %v1703
        %v1770 = vpop.f32.mrf.mxu0
        %v1771 = vadd.f32 0.0, %v1770
        %v1772 = vpop.f32.mrf.mxu0
        %v1773 = vpop.f32.mrf.mxu0
        %v1774 = vadd.f32 0.0, %v1773
        %v1775 = vpop.f32.mrf.mxu0
        %1776 = vmatprep.mubr.bf16.mxu0 0
        %1777 = vmatmul.mubr.bf16.gmra.mxu0 %v1704
        %v1778 = vpop.f32.mrf.mxu0
        %v1779 = vadd.f32 0.0, %v1778
        %v1780 = vpop.f32.mrf.mxu0
        %v1781 = vpop.f32.mrf.mxu0
        %v1782 = vadd.f32 0.0, %v1781
        %v1783 = vpop.f32.mrf.mxu0
        %1784 = vmatprep.mubr.bf16.mxu0 0
        %1785 = vmatmul.mubr.bf16.gmra.mxu0 %v1705
        %v1786 = vpop.f32.mrf.mxu0
        %v1787 = vadd.f32 0.0, %v1786
        %v1788 = vpop.f32.mrf.mxu0
        %v1789 = vpop.f32.mrf.mxu0
        %v1790 = vadd.f32 0.0, %v1789
        %v1791 = vpop.f32.mrf.mxu0
        %1792 = vmatprep.mubr.bf16.mxu0 0
        %1793 = vmatmul.mubr.bf16.gmra.mxu0 %v1706
        %v1794 = vpop.f32.mrf.mxu0
        %v1795 = vadd.f32 0.0, %v1794
        %v1796 = vpop.f32.mrf.mxu0
        %v1797 = vpop.f32.mrf.mxu0
        %v1798 = vadd.f32 0.0, %v1797
        %v1799 = vpop.f32.mrf.mxu0
        %1800 = vmatprep.mubr.bf16.mxu0 0
        %1801 = vmatmul.mubr.bf16.gmra.mxu0 %v1707
        %v1802 = vpop.f32.mrf.mxu0
        %v1803 = vadd.f32 0.0, %v1802
        %v1804 = vpop.f32.mrf.mxu0
        %v1805 = vpop.f32.mrf.mxu0
        %v1806 = vadd.f32 0.0, %v1805
        %v1807 = vpop.f32.mrf.mxu0
        %1808 = vmatprep.mubr.bf16.mxu0 0
        %1809 = vmatmul.mubr.bf16.gmra.mxu0 %v1708
        %v1810 = vpop.f32.mrf.mxu0
        %v1811 = vadd.f32 0.0, %v1810
        %v1812 = vpop.f32.mrf.mxu0
        %v1813 = vpop.f32.mrf.mxu0
        %v1814 = vadd.f32 0.0, %v1813
        %v1815 = vpop.f32.mrf.mxu0
        %1816 = vmatprep.mubr.bf16.mxu0 0
        %1817 = vmatmul.mubr.bf16.gmra.mxu0 %v1709
        %v1818 = vpop.f32.mrf.mxu0
        %v1819 = vadd.f32 0.0, %v1818
        %v1820 = vpop.f32.mrf.mxu0
        %v1821 = vpop.f32.mrf.mxu0
        %v1822 = vadd.f32 0.0, %v1821
        %v1823 = vpop.f32.mrf.mxu0
        %1824 = vmatprep.mubr.bf16.mxu0 0
        %1825 = vmatmul.mubr.bf16.gmra.mxu0 %v1710
        %v1826 = vpop.f32.mrf.mxu0
        %v1827 = vadd.f32 0.0, %v1826
        %v1828 = vpop.f32.mrf.mxu0
        %v1829 = vpop.f32.mrf.mxu0
        %v1830 = vadd.f32 0.0, %v1829
        %v1831 = vpop.f32.mrf.mxu0
        %1832 = vdwg.mxu0
        %s1833 = scalar_lea.vmem %s312, 128 [#allocation12]
        %1834 = vst [vmem:[%s1833] sm:$0xff] %v1771
        %1835 = vst [vmem:[%s1833 + $0x8] sm:$0xff] %v1774
        %1836 = vst [vmem:[%s1833 + $0x10] sm:$0xff] %v1779
        %1837 = vst [vmem:[%s1833 + $0x18] sm:$0xff] %v1782
        %1838 = vst [vmem:[%s1833 + $0x20] sm:$0xff] %v1787
        %1839 = vst [vmem:[%s1833 + $0x28] sm:$0xff] %v1790
        %1840 = vst [vmem:[%s1833 + $0x30] sm:$0xff] %v1795
        %1841 = vst [vmem:[%s1833 + $0x38] sm:$0xff] %v1798
        %1842 = vst [vmem:[%s1833 + $0x40] sm:$0xff] %v1803
        %1843 = vst [vmem:[%s1833 + $0x48] sm:$0xff] %v1806
        %1844 = vst [vmem:[%s1833 + $0x50] sm:$0xff] %v1811
        %1845 = vst [vmem:[%s1833 + $0x58] sm:$0xff] %v1814
        %1846 = vst [vmem:[%s1833 + $0x60] sm:$0xff] %v1819
        %1847 = vst [vmem:[%s1833 + $0x68] sm:$0xff] %v1822
        %1848 = vst [vmem:[%s1833 + $0x70] sm:$0xff] %v1827
        %1849 = vst [vmem:[%s1833 + $0x78] sm:$0xff] %v1830
        %s1850 = sand.u32 %s134, 1
        %s1851 = scalar_lea.sflag [#allocation6], %s1850
        %s1852 = sand.u32 %s134, 1
        %s1853 = smul.addr %s1852, 256
        %s1854 = scalar_lea.vmem [#allocation12], %s1853
        // Predicated region
        $region53: #{tpu_custom_call.1} parent=35 // pred_check
          %p1855 = pneg %p144
        $region54: #{tpu_custom_call.1} parent=35 // pred_check_branch
          %1857 = sbr.rel (%p1855) target = $region56
        $region55: #{tpu_custom_call.1} parent=35 // pred_region
          %s1858 = smul.u32 2, %s27
          %s1860 = ssub.s32 4096, 4096
          %1861 = vsyncadd %s1851, %s1860
          %s1862 = smul.addr %s1858, 16
          %s1863 = smul.addr %s1862, 128
          %s1864 = scalar_lea.hbm %s5, %s1863
          %s1865 = sshll.u32 %s1854, 4
          %s1866 = int_to_ptr.vmem [resolvable:$true] %s1865
          %1871 = dma.vmem_to_hbm [thread:$0]  %s1866, 4096, %s1864, %s1851, 128, 128, 8
        $region56: #{tpu_custom_call.1} parent=35 // pred_fallthru
          _
      $region36: #{tpu_custom_call.1} parent=5 // pred_fallthru
        _
      %p1872 = scmp.le.s32.totalorder 2, %s22
      // Predicated region
      $region57: #{tpu_custom_call.1} parent=5 // pred_check
        %p1873 = pneg %p1872
      $region58: #{tpu_custom_call.1} parent=5 // pred_check_branch
        %1875 = sbr.rel (%p1873) target = $region60
      $region59: #{tpu_custom_call.1} parent=5 // pred_region
        %s1876 = ssub.s32 %s22, 2
        // Predicated region
        $region61: #{tpu_custom_call.1} parent=59 // pred_check
          %p1877 = pneg %p150
        $region62: #{tpu_custom_call.1} parent=59 // pred_check_branch
          %1879 = sbr.rel (%p1877) target = $region64
        $region63: #{tpu_custom_call.1} parent=59 // pred_region
          %s1880 = sand.u32 %s135, 1
          %s1881 = scalar_lea.sflag [#allocation6], %s1880
          %s1882 = sand.u32 %s135, 1
          %s1883 = smul.addr %s1882, 256
          %s1884 = scalar_lea.vmem [#allocation12], %s1883
          %1885 = dma.done %s1881, 4096
        $region64: #{tpu_custom_call.1} parent=59 // pred_fallthru
          _
      $region60: #{tpu_custom_call.1} parent=5 // pred_fallthru
        _
    $region6: #{tpu_custom_call.1} parent=1 // loop_footer
      %s26 = sadd.s32 1, %s22
    $region7: #{tpu_custom_call.1} parent=1 // loop_footer_branch
      %21 = sbr.rel target = $region3
    $region8: #{tpu_custom_call.1} parent=1 // loop_exit
      _
    %1886 = vsyncpa [#allocation5], 1
    %s1887 = scalar_lea.sflag [#allocation5], 1
    %1888 = vsyncpa %s1887, 1
    %1889 = vsyncpa [#allocation8], 1
    %s1890 = scalar_lea.sflag [#allocation8], 1
    %1891 = vsyncpa %s1890, 1
    %1892 = vsyncpa [#allocation11], 1
    %1893 = vsyncpa [#allocation6], 1
    %s1894 = scalar_lea.sflag [#allocation6], 1
    %1895 = vsyncpa %s1894, 1

</llo_original>
